<compile_context>
chip_gen: v7x
topology: tpu7x:2x2x1
jax: 0.10.0
libtpu: 0.0.40
codegen_flags: <defaults>
</compile_context>

<pallas_src>
import functools

import jax
import jax.numpy as jnp
from jax.experimental import pallas as pl
from jax.experimental.pallas import tpu as pltpu


def _round_up(x, m):
    return ((x + m - 1) // m) * m


# ----------------------------- fully fused kernel (whole net, one call) -----------------------------

def _fused_ginnet_kernel(eps_ref, x_ref, adj_ref, wf_ref, bf_ref,
                         wm_ref, bm_ref, lsc_ref, lsh_ref, wp_ref, bp_ref,
                         score_ref, *, n_layers, n_mlp, batch_norm, residual):
    # features_h + prediction from hidden_rep[0]
    h = jnp.dot(x_ref[...], wf_ref[...], preferred_element_type=jnp.float32) + bf_ref[...]
    score = jnp.dot(h, wp_ref[0], preferred_element_type=jnp.float32) + bp_ref[0]

    for l in range(n_layers):
        h_in = h
        # neighbor sum on the MXU: bf16 adjacency x bf16 h, f32 accumulation.
        neigh = jnp.dot(adj_ref[...], h.astype(jnp.bfloat16),
                        preferred_element_type=jnp.float32)
        x = (1.0 + eps_ref[l]) * h + neigh

        # MLP with eval-mode BNs folded into the weights; the last linear carries the
        # ApplyNodeFunc BN fold and the trailing ReLU is ApplyNodeFunc's ReLU.
        for m in range(n_mlp):
            idx = l * n_mlp + m
            x = jnp.maximum(
                jnp.dot(x, wm_ref[idx], preferred_element_type=jnp.float32) + bm_ref[idx],
                0.0)

        # GINLayer batch-norm (eval-mode scale/shift) + ReLU
        if batch_norm:
            x = x * lsc_ref[l] + lsh_ref[l]
        x = jnp.maximum(x, 0.0)

        if residual:
            x = x + h_in
        h = x

        # running prediction-score accumulation (stays in VMEM, never round-trips HBM)
        score = score + jnp.dot(h, wp_ref[l + 1],
                                preferred_element_type=jnp.float32) + bp_ref[l + 1]

    score_ref[...] = score


def ginnet_fused(x, adj, params, *, n_layers, n_mlp, batch_norm, residual):
    n_pad, in_p = x.shape
    hp = params["w_feat"].shape[1]
    cp = params["w_pred"].shape[-1]

    w_mlp = params["w_mlp"].reshape(n_layers * n_mlp, hp, hp)
    b_mlp = params["b_mlp"].reshape(n_layers * n_mlp, 1, hp)

    kern = functools.partial(_fused_ginnet_kernel, n_layers=n_layers, n_mlp=n_mlp,
                             batch_norm=batch_norm, residual=residual)

    vspec = pl.BlockSpec(memory_space=pltpu.MemorySpace.VMEM)
    sspec = pl.BlockSpec(memory_space=pltpu.MemorySpace.SMEM)

    flops = (2 * n_pad * in_p * hp
             + n_layers * (2 * n_pad * n_pad * hp + n_mlp * 2 * n_pad * hp * hp)
             + (n_layers + 1) * 2 * n_pad * hp * cp)
    in_bytes = int(x.size) * 4 + int(adj.size) * 2 + 4 * sum(
        int(v.size) for v in (params["w_feat"], params["b_feat"], w_mlp, b_mlp,
                              params["layer_scale"], params["layer_shift"],
                              params["w_pred"], params["b_pred"]))
    bytes_accessed = in_bytes + n_pad * cp * 4
    est_vmem = in_bytes + 10 * n_pad * hp * 4 + n_pad * cp * 4 + (2 << 20)
    vmem_limit = int(min(max(est_vmem, 32 << 20), 56 << 20))

    return pl.pallas_call(
        kern,
        out_shape=jax.ShapeDtypeStruct((n_pad, cp), jnp.float32),
        in_specs=[sspec] + [vspec] * 10,
        out_specs=vspec,
        compiler_params=pltpu.CompilerParams(vmem_limit_bytes=vmem_limit),
        cost_estimate=pl.CostEstimate(flops=int(flops), transcendentals=0,
                                      bytes_accessed=int(bytes_accessed)),
    )(params["eps"], x, adj, params["w_feat"], params["b_feat"],
      w_mlp, b_mlp, params["layer_scale"], params["layer_shift"],
      params["w_pred"], params["b_pred"])


# ----------------------------- tiled fallback (one fused call per GIN layer) -----------------------------

def _features_score_kernel(x_ref, wf_ref, bf_ref, wp_ref, bp_ref, h_out_ref, s_out_ref):
    h0 = jnp.dot(x_ref[...], wf_ref[...], preferred_element_type=jnp.float32) + bf_ref[...]
    h_out_ref[...] = h0.astype(h_out_ref.dtype)          # carried in bf16 between layers
    s_out_ref[...] = jnp.dot(h0, wp_ref[...], preferred_element_type=jnp.float32) + bp_ref[...]


def features_and_score(x, wf, bf, wp, bp, *, tm):
    n_pad, in_p = x.shape
    hp = wf.shape[1]
    cp = wp.shape[1]
    return pl.pallas_call(
        _features_score_kernel,
        out_shape=(jax.ShapeDtypeStruct((n_pad, hp), jnp.bfloat16),
                   jax.ShapeDtypeStruct((n_pad, cp), jnp.float32)),
        grid=(n_pad // tm,),
        in_specs=[
            pl.BlockSpec((tm, in_p), lambda i: (i, 0)),
            pl.BlockSpec((in_p, hp), lambda i: (0, 0)),
            pl.BlockSpec((1, hp), lambda i: (0, 0)),
            pl.BlockSpec((hp, cp), lambda i: (0, 0)),
            pl.BlockSpec((1, cp), lambda i: (0, 0)),
        ],
        out_specs=(pl.BlockSpec((tm, hp), lambda i: (i, 0)),
                   pl.BlockSpec((tm, cp), lambda i: (i, 0))),
        compiler_params=pltpu.CompilerParams(dimension_semantics=("parallel",)),
    )(x, wf, bf, wp, bp)


def _gin_layer_kernel(eps_ref, adj_ref, hrow_ref, hall_ref, wm_ref, bm_ref,
                      lsc_ref, lsh_ref, wp_ref, bp_ref, s_in_ref,
                      h_out_ref, s_out_ref, *, n_mlp, batch_norm, residual):
    # statically-shaped, lane-aligned self-term tile (no dynamic slice of the resident h)
    h_row = hrow_ref[...].astype(jnp.float32)                       # (tm, HP)

    # neighbor sum: bf16 adj row-block x bf16 resident h, f32 accumulation (no f32 upcast)
    neigh = jnp.dot(adj_ref[...], hall_ref[...], preferred_element_type=jnp.float32)
    x = (1.0 + eps_ref[0, 0]) * h_row + neigh

    for m in range(n_mlp):
        x = jnp.maximum(
            jnp.dot(x, wm_ref[m], preferred_element_type=jnp.float32) + bm_ref[m], 0.0)

    if batch_norm:
        x = x * lsc_ref[...] + lsh_ref[...]
    x = jnp.maximum(x, 0.0)

    if residual:
        x = x + h_row
    h_out_ref[...] = x.astype(h_out_ref.dtype)                      # bf16 carry

    # running prediction-score accumulation (output aliased onto s_in buffer)
    s_out_ref[...] = s_in_ref[...] + (
        jnp.dot(x, wp_ref[...], preferred_element_type=jnp.float32) + bp_ref[...])


def gin_layer(adj, h, score, eps, w_mlp, b_mlp, lsc, lsh, wp, bp, *,
              tm, n_mlp, batch_norm, residual):
    n_pad, hp = h.shape
    cp = score.shape[1]
    kern = functools.partial(_gin_layer_kernel, n_mlp=n_mlp,
                             batch_norm=batch_norm, residual=residual)

    flops = 2 * n_pad * n_pad * hp + n_mlp * 2 * n_pad * hp * hp + 2 * n_pad * hp * cp
    bytes_accessed = int(adj.size) * 2 + 4 * int(h.size) + 4 * int(w_mlp.size) + 8 * int(score.size)
    est_vmem = (2 * (tm * n_pad * 2 + tm * hp * 2 + tm * cp * 4)       # streamed blocks (x2 buf)
                + 2 * (n_pad * hp * 2)                                  # resident h (x2 buf)
                + 2 * 4 * (int(w_mlp.size) + int(b_mlp.size) + 2 * hp + hp * cp + cp)
                + 2 * (tm * hp * 2 + tm * cp * 4)                       # outputs
                + (2 << 20))
    vmem_limit = int(min(max(est_vmem, 32 << 20), 56 << 20))

    return pl.pallas_call(
        kern,
        out_shape=(jax.ShapeDtypeStruct((n_pad, hp), jnp.bfloat16),
                   jax.ShapeDtypeStruct((n_pad, cp), jnp.float32)),
        grid=(n_pad // tm,),
        in_specs=[
            pl.BlockSpec(memory_space=pltpu.MemorySpace.SMEM),       # eps (1,1) scalar
            pl.BlockSpec((tm, n_pad), lambda i: (i, 0)),             # adj row block (bf16)
            pl.BlockSpec((tm, hp), lambda i: (i, 0)),                # h self-term tile (bf16)
            pl.BlockSpec((n_pad, hp), lambda i: (0, 0)),             # full resident h (bf16)
            pl.BlockSpec((n_mlp, hp, hp), lambda i: (0, 0, 0)),      # folded MLP weights
            pl.BlockSpec((n_mlp, 1, hp), lambda i: (0, 0, 0)),       # folded MLP biases
            pl.BlockSpec((1, hp), lambda i: (0, 0)),                 # layer-BN scale
            pl.BlockSpec((1, hp), lambda i: (0, 0)),                 # layer-BN shift
            pl.BlockSpec((hp, cp), lambda i: (0, 0)),                # prediction W
            pl.BlockSpec((1, cp), lambda i: (0, 0)),                 # prediction b
            pl.BlockSpec((tm, cp), lambda i: (i, 0)),                # score in
        ],
        out_specs=(pl.BlockSpec((tm, hp), lambda i: (i, 0)),
                   pl.BlockSpec((tm, cp), lambda i: (i, 0))),
        input_output_aliases={10: 1},                                # score accumulates in place
        compiler_params=pltpu.CompilerParams(
            dimension_semantics=("parallel",), vmem_limit_bytes=vmem_limit),
        cost_estimate=pl.CostEstimate(flops=int(flops), transcendentals=0,
                                      bytes_accessed=int(bytes_accessed)),
    )(eps, adj, h, h, w_mlp, b_mlp, lsc, lsh, wp, bp, score)


# ----------------------------- parameter init (fold eval-BN + lane-pad) -----------------------------

def _init_linear(key, din, dout):
    k1, k2 = jax.random.split(key)
    bound = 1.0 / (din ** 0.5)
    w = jax.random.uniform(k1, (din, dout), jnp.float32, -bound, bound)
    b = jax.random.uniform(k2, (1, dout), jnp.float32, -bound, bound)
    return w, b


def _init_bn(key, dim, eps=1e-5):
    # eval-mode BN == per-feature affine: scale / shift
    k1, k2, k3, k4 = jax.random.split(key, 4)
    gamma = 1.0 + 0.1 * jax.random.normal(k1, (1, dim), jnp.float32)
    beta = 0.1 * jax.random.normal(k2, (1, dim), jnp.float32)
    running_mean = 0.1 * jax.random.normal(k3, (1, dim), jnp.float32)
    running_var = 1.0 + 0.1 * jax.random.uniform(k4, (1, dim), jnp.float32)
    scale = gamma / jnp.sqrt(running_var + eps)
    shift = beta - running_mean * scale
    return scale, shift


def _pad2(a, r, c):
    return jnp.pad(a, ((0, r - a.shape[0]), (0, c - a.shape[1])))


def init_ginnet_params(key, in_dim, hidden_dim, n_classes, n_layers, n_mlp_layers):
    in_p = _round_up(in_dim, 128)
    hp = _round_up(hidden_dim, 128)
    cp = _round_up(n_classes, 128)

    keys = jax.random.split(key, 2 + n_layers)

    # features_h linear (no BN attached -> no fold)
    wf, bf = _init_linear(keys[0], in_dim, hidden_dim)

    # prediction linears, one per hidden representation (L + 1 of them)
    pred_keys = jax.random.split(keys[1], n_layers + 1)
    preds = [_init_linear(pred_keys[i], hidden_dim, n_classes) for i in range(n_layers + 1)]

    w_mlp_L, b_mlp_L, lsc_L, lsh_L = [], [], [], []
    for l in range(n_layers):
        lk = jax.random.split(keys[2 + l], 2 * n_mlp_layers + 2)
        w_list, b_list = [], []
        for m in range(n_mlp_layers):
            w, b = _init_linear(lk[m], hidden_dim, hidden_dim)
            if m < n_mlp_layers - 1:
                scale, shift = _init_bn(lk[n_mlp_layers + m], hidden_dim)  # MLP internal BN
            else:
                scale, shift = _init_bn(lk[-2], hidden_dim)                # ApplyNodeFunc BN
            w_f = w * scale                          # exact eval-mode BN fold
            b_f = b * scale + shift
            w_list.append(_pad2(w_f, hp, hp))
            b_list.append(_pad2(b_f, 1, hp))
        lscale, lshift = _init_bn(lk[-1], hidden_dim)                      # GINLayer BN
        lscale = jnp.pad(lscale, ((0, 0), (0, hp - hidden_dim)), constant_values=1.0)
        lshift = _pad2(lshift, 1, hp)
        w_mlp_L.append(jnp.stack(w_list))
        b_mlp_L.append(jnp.stack(b_list))
        lsc_L.append(lscale)
        lsh_L.append(lshift)

    return dict(
        w_feat=_pad2(wf, in_p, hp), b_feat=_pad2(bf, 1, hp),
        eps=jnp.zeros((n_layers,), jnp.float32),          # init_eps = 0, learn_eps = False
        w_mlp=jnp.stack(w_mlp_L),                          # (L, n_mlp, HP, HP)
        b_mlp=jnp.stack(b_mlp_L),                          # (L, n_mlp, 1, HP)
        layer_scale=jnp.stack(lsc_L),                      # (L, 1, HP)
        layer_shift=jnp.stack(lsh_L),                      # (L, 1, HP)
        w_pred=jnp.stack([_pad2(w, hp, cp) for w, _ in preds]),   # (L+1, HP, CP)
        b_pred=jnp.stack([_pad2(b, 1, cp) for _, b in preds]),    # (L+1, 1, CP)
    )


# ----------------------------- forward pass -----------------------------

def ginnet_forward(adj, h, params, *, n_layers, n_mlp_layers, n_classes,
                   batch_norm=True, residual=True, force_tiled=False):
    n = h.shape[0]
    in_p = params["w_feat"].shape[0]

    # Fused single-call path whenever the bf16 adjacency + weights comfortably fit VMEM.
    use_fused = (not force_tiled) and (n <= 2048)
    if use_fused:
        n_pad = _round_up(max(n, 1), 128)
        tm = None
    else:
        tm = 256
        n_pad = _round_up(max(n, 1), tm)

    # lane-dense zero padding; adjacency stored/streamed as bf16 (exact for {0,1} edges)
    # TODO(synk): weighted edges would need f32 (or int8/fp8 quantised) adjacency storage.
    x = jnp.zeros((n_pad, in_p), jnp.float32).at[:n, :h.shape[1]].set(h)
    a = jnp.zeros((n_pad, n_pad), jnp.float32).at[:n, :n].set(adj).astype(jnp.bfloat16)

    if use_fused:
        score = ginnet_fused(x, a, params, n_layers=n_layers, n_mlp=n_mlp_layers,
                             batch_norm=batch_norm, residual=residual)
        return score[:n, :n_classes]

    hcur, score = features_and_score(x, params["w_feat"], params["b_feat"],
                                     params["w_pred"][0], params["b_pred"][0], tm=tm)
    for l in range(n_layers):
        hcur, score = gin_layer(
            a, hcur, score,
            params["eps"][l].reshape(1, 1),
            params["w_mlp"][l], params["b_mlp"][l],
            params["layer_scale"][l], params["layer_shift"][l],
            params["w_pred"][l + 1], params["b_pred"][l + 1],
            tm=tm, n_mlp=n_mlp_layers, batch_norm=batch_norm, residual=residual)
    return score[:n, :n_classes]


# ----------------------------- pure-JAX reference (f32, same folded params) -----------------------------

def ginnet_reference(adj, h, params, *, n_layers, n_mlp_layers, n_classes,
                     batch_norm=True, residual=True):
    n = h.shape[0]
    in_p = params["w_feat"].shape[0]
    n_pad = _round_up(max(n, 1), 128)
    x = jnp.zeros((n_pad, in_p), jnp.float32).at[:n, :h.shape[1]].set(h)
    a = jnp.zeros((n_pad, n_pad), jnp.float32).at[:n, :n].set(adj)

    hh = x @ params["w_feat"] + params["b_feat"]
    score = hh @ params["w_pred"][0] + params["b_pred"][0]
    for l in range(n_layers):
        h_in = hh
        xx = (1.0 + params["eps"][l]) * hh + a @ hh
        for m in range(n_mlp_layers):
            xx = jnp.maximum(xx @ params["w_mlp"][l, m] + params["b_mlp"][l, m], 0.0)
        if batch_norm:
            xx = xx * params["layer_scale"][l] + params["layer_shift"][l]
        xx = jnp.maximum(xx, 0.0)
        if residual:
            xx = xx + h_in
        hh = xx
        score = score + hh @ params["w_pred"][l + 1] + params["b_pred"][l + 1]
    return score[:n, :n_classes]


# ----------------------------- demo -----------------------------

if __name__ == "__main__":
    in_dim, hidden_dim, n_classes = 8, 32, 4
    n_layers, n_mlp_layers = 2, 2
    n_nodes = 32

    key = jax.random.PRNGKey(0)
    k_param, k_feat, k_adj = jax.random.split(key, 3)

    params = init_ginnet_params(
        k_param, in_dim, hidden_dim, n_classes, n_layers, n_mlp_layers
    )

    # node features h: (N, in_dim); dense adjacency: (N, N) with adj[v, u] = 1 iff u->v
    h = jax.random.normal(k_feat, (n_nodes, in_dim), jnp.float32)
    adj = jax.random.bernoulli(k_adj, 0.2, (n_nodes, n_nodes)).astype(jnp.float32)
    adj = adj * (1.0 - jnp.eye(n_nodes, dtype=jnp.float32))   # no self loops

    common = dict(n_layers=n_layers, n_mlp_layers=n_mlp_layers, n_classes=n_classes,
                  batch_norm=True, residual=True)

    fwd_fused = jax.jit(functools.partial(ginnet_forward, **common))
    fwd_tiled = jax.jit(functools.partial(ginnet_forward, force_tiled=True, **common))

    scores = fwd_fused(adj, h, params)
    scores_tiled = fwd_tiled(adj, h, params)
    jax.block_until_ready(scores)
    jax.block_until_ready(scores_tiled)

    assert scores.shape == (n_nodes, n_classes)
    assert scores_tiled.shape == (n_nodes, n_classes)

    ref = ginnet_reference(adj, h, params, **common)
    tol = 5e-2 + 2e-2 * float(jnp.max(jnp.abs(ref)))   # bf16 aggregation / bf16-carried h
    err_fused = float(jnp.max(jnp.abs(scores - ref)))
    err_tiled = float(jnp.max(jnp.abs(scores_tiled - ref)))
    assert err_fused < tol and err_tiled < tol, (err_fused, err_tiled, tol)

    print("KERNEL_OK")
</pallas_src>

<mosaic_0001>
module attributes {stable_mosaic.version = 11 : i64} {
  func.func @_fused_ginnet_kernel(%arg0: memref<2xf32, #tpu.memory_space<smem>>, %arg1: memref<128x128xf32, #tpu.memory_space<vmem>>, %arg2: memref<128x128xbf16, #tpu.memory_space<vmem>>, %arg3: memref<128x128xf32, #tpu.memory_space<vmem>>, %arg4: memref<1x128xf32, #tpu.memory_space<vmem>>, %arg5: memref<4x128x128xf32, #tpu.memory_space<vmem>>, %arg6: memref<4x1x128xf32, #tpu.memory_space<vmem>>, %arg7: memref<2x1x128xf32, #tpu.memory_space<vmem>>, %arg8: memref<2x1x128xf32, #tpu.memory_space<vmem>>, %arg9: memref<3x128x128xf32, #tpu.memory_space<vmem>>, %arg10: memref<3x1x128xf32, #tpu.memory_space<vmem>>, %arg11: memref<128x128xf32, #tpu.memory_space<vmem>>) attributes {dimension_semantics = [], scalar_prefetch = 0 : i64, scratch_operands = 0 : i64, tpu.core_type = #tpu.core_type<tc>} {
    %c0 = arith.constant 0 : index
    %c0_0 = arith.constant 0 : index
    %0 = vector.load %arg1[%c0, %c0_0] : memref<128x128xf32, #tpu.memory_space<vmem>>, vector<128x128xf32>
    %c0_1 = arith.constant 0 : index
    %c0_2 = arith.constant 0 : index
    %1 = vector.load %arg3[%c0_1, %c0_2] : memref<128x128xf32, #tpu.memory_space<vmem>>, vector<128x128xf32>
    %cst = arith.constant dense<0.000000e+00> : vector<128x128xf32>
    %2 = tpu.matmul %0, %1, %cst {dimension_numbers = #tpu.dot_dimension_numbers<[1], [0], [0], [1], [0, 0, 1, 1], [], []>} : vector<128x128xf32>, vector<128x128xf32>, vector<128x128xf32> -> vector<128x128xf32>
    %c0_3 = arith.constant 0 : index
    %c0_4 = arith.constant 0 : index
    %3 = vector.load %arg4[%c0_3, %c0_4] : memref<1x128xf32, #tpu.memory_space<vmem>>, vector<1x128xf32>
    %4 = vector.broadcast %3 : vector<1x128xf32> to vector<128x128xf32>
    %5 = arith.addf %2, %4 : vector<128x128xf32>
    %c0_5 = arith.constant 0 : index
    %c0_6 = arith.constant 0 : index
    %c0_7 = arith.constant 0 : index
    %6 = vector.load %arg9[%c0_5, %c0_6, %c0_7] : memref<3x128x128xf32, #tpu.memory_space<vmem>>, vector<1x128x128xf32>
    %7 = vector.shape_cast %6 : vector<1x128x128xf32> to vector<128x128xf32>
    %cst_8 = arith.constant dense<0.000000e+00> : vector<128x128xf32>
    %8 = tpu.matmul %5, %7, %cst_8 {dimension_numbers = #tpu.dot_dimension_numbers<[1], [0], [0], [1], [0, 0, 1, 1], [], []>} : vector<128x128xf32>, vector<128x128xf32>, vector<128x128xf32> -> vector<128x128xf32>
    %c0_9 = arith.constant 0 : index
    %c0_10 = arith.constant 0 : index
    %c0_11 = arith.constant 0 : index
    %9 = vector.load %arg10[%c0_9, %c0_10, %c0_11] : memref<3x1x128xf32, #tpu.memory_space<vmem>>, vector<1x1x128xf32>
    %10 = vector.shape_cast %9 : vector<1x1x128xf32> to vector<1x128xf32>
    %11 = vector.broadcast %10 : vector<1x128xf32> to vector<128x128xf32>
    %12 = arith.addf %8, %11 : vector<128x128xf32>
    %c0_12 = arith.constant 0 : index
    %c0_13 = arith.constant 0 : index
    %13 = vector.load %arg2[%c0_12, %c0_13] : memref<128x128xbf16, #tpu.memory_space<vmem>>, vector<128x128xbf16>
    %14 = arith.truncf %5 : vector<128x128xf32> to vector<128x128xbf16>
    %cst_14 = arith.constant dense<0.000000e+00> : vector<128x128xf32>
    %15 = tpu.matmul %13, %14, %cst_14 {dimension_numbers = #tpu.dot_dimension_numbers<[1], [0], [0], [1], [0, 0, 1, 1], [], []>} : vector<128x128xbf16>, vector<128x128xbf16>, vector<128x128xf32> -> vector<128x128xf32>
    %c0_15 = arith.constant 0 : index
    %16 = memref.load %arg0[%c0_15] : memref<2xf32, #tpu.memory_space<smem>>
    %cst_16 = arith.constant 1.000000e+00 : f32
    %17 = arith.addf %cst_16, %16 : f32
    %18 = vector.broadcast %17 : f32 to vector<128x128xf32>
    %19 = arith.mulf %18, %5 : vector<128x128xf32>
    %20 = arith.addf %19, %15 : vector<128x128xf32>
    %c0_17 = arith.constant 0 : index
    %c0_18 = arith.constant 0 : index
    %c0_19 = arith.constant 0 : index
    %21 = vector.load %arg5[%c0_17, %c0_18, %c0_19] : memref<4x128x128xf32, #tpu.memory_space<vmem>>, vector<1x128x128xf32>
    %22 = vector.shape_cast %21 : vector<1x128x128xf32> to vector<128x128xf32>
    %cst_20 = arith.constant dense<0.000000e+00> : vector<128x128xf32>
    %23 = tpu.matmul %20, %22, %cst_20 {dimension_numbers = #tpu.dot_dimension_numbers<[1], [0], [0], [1], [0, 0, 1, 1], [], []>} : vector<128x128xf32>, vector<128x128xf32>, vector<128x128xf32> -> vector<128x128xf32>
    %c0_21 = arith.constant 0 : index
    %c0_22 = arith.constant 0 : index
    %c0_23 = arith.constant 0 : index
    %24 = vector.load %arg6[%c0_21, %c0_22, %c0_23] : memref<4x1x128xf32, #tpu.memory_space<vmem>>, vector<1x1x128xf32>
    %25 = vector.shape_cast %24 : vector<1x1x128xf32> to vector<1x128xf32>
    %26 = vector.broadcast %25 : vector<1x128xf32> to vector<128x128xf32>
    %27 = arith.addf %23, %26 : vector<128x128xf32>
    %cst_24 = arith.constant 0.000000e+00 : f32
    %28 = vector.broadcast %cst_24 : f32 to vector<128x128xf32>
    %29 = arith.maximumf %27, %28 : vector<128x128xf32>
    %c1 = arith.constant 1 : index
    %c0_25 = arith.constant 0 : index
    %c0_26 = arith.constant 0 : index
    %30 = vector.load %arg5[%c1, %c0_25, %c0_26] : memref<4x128x128xf32, #tpu.memory_space<vmem>>, vector<1x128x128xf32>
    %31 = vector.shape_cast %30 : vector<1x128x128xf32> to vector<128x128xf32>
    %cst_27 = arith.constant dense<0.000000e+00> : vector<128x128xf32>
    %32 = tpu.matmul %29, %31, %cst_27 {dimension_numbers = #tpu.dot_dimension_numbers<[1], [0], [0], [1], [0, 0, 1, 1], [], []>} : vector<128x128xf32>, vector<128x128xf32>, vector<128x128xf32> -> vector<128x128xf32>
    %c1_28 = arith.constant 1 : index
    %c0_29 = arith.constant 0 : index
    %c0_30 = arith.constant 0 : index
    %33 = vector.load %arg6[%c1_28, %c0_29, %c0_30] : memref<4x1x128xf32, #tpu.memory_space<vmem>>, vector<1x1x128xf32>
    %34 = vector.shape_cast %33 : vector<1x1x128xf32> to vector<1x128xf32>
    %35 = vector.broadcast %34 : vector<1x128xf32> to vector<128x128xf32>
    %36 = arith.addf %32, %35 : vector<128x128xf32>
    %cst_31 = arith.constant 0.000000e+00 : f32
    %37 = vector.broadcast %cst_31 : f32 to vector<128x128xf32>
    %38 = arith.maximumf %36, %37 : vector<128x128xf32>
    %c0_32 = arith.constant 0 : index
    %c0_33 = arith.constant 0 : index
    %c0_34 = arith.constant 0 : index
    %39 = vector.load %arg7[%c0_32, %c0_33, %c0_34] : memref<2x1x128xf32, #tpu.memory_space<vmem>>, vector<1x1x128xf32>
    %40 = vector.shape_cast %39 : vector<1x1x128xf32> to vector<1x128xf32>
    %41 = vector.broadcast %40 : vector<1x128xf32> to vector<128x128xf32>
    %42 = arith.mulf %38, %41 : vector<128x128xf32>
    %c0_35 = arith.constant 0 : index
    %c0_36 = arith.constant 0 : index
    %c0_37 = arith.constant 0 : index
    %43 = vector.load %arg8[%c0_35, %c0_36, %c0_37] : memref<2x1x128xf32, #tpu.memory_space<vmem>>, vector<1x1x128xf32>
    %44 = vector.shape_cast %43 : vector<1x1x128xf32> to vector<1x128xf32>
    %45 = vector.broadcast %44 : vector<1x128xf32> to vector<128x128xf32>
    %46 = arith.addf %42, %45 : vector<128x128xf32>
    %cst_38 = arith.constant 0.000000e+00 : f32
    %47 = vector.broadcast %cst_38 : f32 to vector<128x128xf32>
    %48 = arith.maximumf %46, %47 : vector<128x128xf32>
    %49 = arith.addf %48, %5 : vector<128x128xf32>
    %c1_39 = arith.constant 1 : index
    %c0_40 = arith.constant 0 : index
    %c0_41 = arith.constant 0 : index
    %50 = vector.load %arg9[%c1_39, %c0_40, %c0_41] : memref<3x128x128xf32, #tpu.memory_space<vmem>>, vector<1x128x128xf32>
    %51 = vector.shape_cast %50 : vector<1x128x128xf32> to vector<128x128xf32>
    %cst_42 = arith.constant dense<0.000000e+00> : vector<128x128xf32>
    %52 = tpu.matmul %49, %51, %cst_42 {dimension_numbers = #tpu.dot_dimension_numbers<[1], [0], [0], [1], [0, 0, 1, 1], [], []>} : vector<128x128xf32>, vector<128x128xf32>, vector<128x128xf32> -> vector<128x128xf32>
    %53 = arith.addf %12, %52 : vector<128x128xf32>
    %c1_43 = arith.constant 1 : index
    %c0_44 = arith.constant 0 : index
    %c0_45 = arith.constant 0 : index
    %54 = vector.load %arg10[%c1_43, %c0_44, %c0_45] : memref<3x1x128xf32, #tpu.memory_space<vmem>>, vector<1x1x128xf32>
    %55 = vector.shape_cast %54 : vector<1x1x128xf32> to vector<1x128xf32>
    %56 = vector.broadcast %55 : vector<1x128xf32> to vector<128x128xf32>
    %57 = arith.addf %53, %56 : vector<128x128xf32>
    %c0_46 = arith.constant 0 : index
    %c0_47 = arith.constant 0 : index
    %58 = vector.load %arg2[%c0_46, %c0_47] : memref<128x128xbf16, #tpu.memory_space<vmem>>, vector<128x128xbf16>
    %59 = arith.truncf %49 : vector<128x128xf32> to vector<128x128xbf16>
    %cst_48 = arith.constant dense<0.000000e+00> : vector<128x128xf32>
    %60 = tpu.matmul %58, %59, %cst_48 {dimension_numbers = #tpu.dot_dimension_numbers<[1], [0], [0], [1], [0, 0, 1, 1], [], []>} : vector<128x128xbf16>, vector<128x128xbf16>, vector<128x128xf32> -> vector<128x128xf32>
    %c1_49 = arith.constant 1 : index
    %61 = memref.load %arg0[%c1_49] : memref<2xf32, #tpu.memory_space<smem>>
    %cst_50 = arith.constant 1.000000e+00 : f32
    %62 = arith.addf %cst_50, %61 : f32
    %63 = vector.broadcast %62 : f32 to vector<128x128xf32>
    %64 = arith.mulf %63, %49 : vector<128x128xf32>
    %65 = arith.addf %64, %60 : vector<128x128xf32>
    %c2 = arith.constant 2 : index
    %c0_51 = arith.constant 0 : index
    %c0_52 = arith.constant 0 : index
    %66 = vector.load %arg5[%c2, %c0_51, %c0_52] : memref<4x128x128xf32, #tpu.memory_space<vmem>>, vector<1x128x128xf32>
    %67 = vector.shape_cast %66 : vector<1x128x128xf32> to vector<128x128xf32>
    %cst_53 = arith.constant dense<0.000000e+00> : vector<128x128xf32>
    %68 = tpu.matmul %65, %67, %cst_53 {dimension_numbers = #tpu.dot_dimension_numbers<[1], [0], [0], [1], [0, 0, 1, 1], [], []>} : vector<128x128xf32>, vector<128x128xf32>, vector<128x128xf32> -> vector<128x128xf32>
    %c2_54 = arith.constant 2 : index
    %c0_55 = arith.constant 0 : index
    %c0_56 = arith.constant 0 : index
    %69 = vector.load %arg6[%c2_54, %c0_55, %c0_56] : memref<4x1x128xf32, #tpu.memory_space<vmem>>, vector<1x1x128xf32>
    %70 = vector.shape_cast %69 : vector<1x1x128xf32> to vector<1x128xf32>
    %71 = vector.broadcast %70 : vector<1x128xf32> to vector<128x128xf32>
    %72 = arith.addf %68, %71 : vector<128x128xf32>
    %cst_57 = arith.constant 0.000000e+00 : f32
    %73 = vector.broadcast %cst_57 : f32 to vector<128x128xf32>
    %74 = arith.maximumf %72, %73 : vector<128x128xf32>
    %c3 = arith.constant 3 : index
    %c0_58 = arith.constant 0 : index
    %c0_59 = arith.constant 0 : index
    %75 = vector.load %arg5[%c3, %c0_58, %c0_59] : memref<4x128x128xf32, #tpu.memory_space<vmem>>, vector<1x128x128xf32>
    %76 = vector.shape_cast %75 : vector<1x128x128xf32> to vector<128x128xf32>
    %cst_60 = arith.constant dense<0.000000e+00> : vector<128x128xf32>
    %77 = tpu.matmul %74, %76, %cst_60 {dimension_numbers = #tpu.dot_dimension_numbers<[1], [0], [0], [1], [0, 0, 1, 1], [], []>} : vector<128x128xf32>, vector<128x128xf32>, vector<128x128xf32> -> vector<128x128xf32>
    %c3_61 = arith.constant 3 : index
    %c0_62 = arith.constant 0 : index
    %c0_63 = arith.constant 0 : index
    %78 = vector.load %arg6[%c3_61, %c0_62, %c0_63] : memref<4x1x128xf32, #tpu.memory_space<vmem>>, vector<1x1x128xf32>
    %79 = vector.shape_cast %78 : vector<1x1x128xf32> to vector<1x128xf32>
    %80 = vector.broadcast %79 : vector<1x128xf32> to vector<128x128xf32>
    %81 = arith.addf %77, %80 : vector<128x128xf32>
    %cst_64 = arith.constant 0.000000e+00 : f32
    %82 = vector.broadcast %cst_64 : f32 to vector<128x128xf32>
    %83 = arith.maximumf %81, %82 : vector<128x128xf32>
    %c1_65 = arith.constant 1 : index
    %c0_66 = arith.constant 0 : index
    %c0_67 = arith.constant 0 : index
    %84 = vector.load %arg7[%c1_65, %c0_66, %c0_67] : memref<2x1x128xf32, #tpu.memory_space<vmem>>, vector<1x1x128xf32>
    %85 = vector.shape_cast %84 : vector<1x1x128xf32> to vector<1x128xf32>
    %86 = vector.broadcast %85 : vector<1x128xf32> to vector<128x128xf32>
    %87 = arith.mulf %83, %86 : vector<128x128xf32>
    %c1_68 = arith.constant 1 : index
    %c0_69 = arith.constant 0 : index
    %c0_70 = arith.constant 0 : index
    %88 = vector.load %arg8[%c1_68, %c0_69, %c0_70] : memref<2x1x128xf32, #tpu.memory_space<vmem>>, vector<1x1x128xf32>
    %89 = vector.shape_cast %88 : vector<1x1x128xf32> to vector<1x128xf32>
    %90 = vector.broadcast %89 : vector<1x128xf32> to vector<128x128xf32>
    %91 = arith.addf %87, %90 : vector<128x128xf32>
    %cst_71 = arith.constant 0.000000e+00 : f32
    %92 = vector.broadcast %cst_71 : f32 to vector<128x128xf32>
    %93 = arith.maximumf %91, %92 : vector<128x128xf32>
    %94 = arith.addf %93, %49 : vector<128x128xf32>
    %c2_72 = arith.constant 2 : index
    %c0_73 = arith.constant 0 : index
    %c0_74 = arith.constant 0 : index
    %95 = vector.load %arg9[%c2_72, %c0_73, %c0_74] : memref<3x128x128xf32, #tpu.memory_space<vmem>>, vector<1x128x128xf32>
    %96 = vector.shape_cast %95 : vector<1x128x128xf32> to vector<128x128xf32>
    %cst_75 = arith.constant dense<0.000000e+00> : vector<128x128xf32>
    %97 = tpu.matmul %94, %96, %cst_75 {dimension_numbers = #tpu.dot_dimension_numbers<[1], [0], [0], [1], [0, 0, 1, 1], [], []>} : vector<128x128xf32>, vector<128x128xf32>, vector<128x128xf32> -> vector<128x128xf32>
    %98 = arith.addf %57, %97 : vector<128x128xf32>
    %c2_76 = arith.constant 2 : index
    %c0_77 = arith.constant 0 : index
    %c0_78 = arith.constant 0 : index
    %99 = vector.load %arg10[%c2_76, %c0_77, %c0_78] : memref<3x1x128xf32, #tpu.memory_space<vmem>>, vector<1x1x128xf32>
    %100 = vector.shape_cast %99 : vector<1x1x128xf32> to vector<1x128xf32>
    %101 = vector.broadcast %100 : vector<1x128xf32> to vector<128x128xf32>
    %102 = arith.addf %98, %101 : vector<128x128xf32>
    %c0_79 = arith.constant 0 : index
    %c0_80 = arith.constant 0 : index
    %103 = vector.load %arg11[%c0_79, %c0_80] : memref<128x128xf32, #tpu.memory_space<vmem>>, vector<128x128xf32>
    tpu.vector_store %arg11[%c0_79, %c0_80], %102 {strides = array<i32>} : memref<128x128xf32, #tpu.memory_space<vmem>>, vector<128x128xf32>,
    return
  }
}

</mosaic_0001>

<llo_original>
// kernel: ginnet_forward.1
$region0: #{ginnet_forward.1}
  #allocation0 [shape = 'u32[]', space=smem, size = 0x4, offset = 0x4, fixed_abs, tag = 'smem constant byte address 0x4 - core index']
  #allocation1 [shape = 'u32[144,128]{1,0:T(1,128)}', space=vmem, size = 0x12000, scoped, tag = 'internal scratch']
  %s0 = inlined_call_operand.vmem [shape: f32[2], index: 0, kind: input, shape index: {}]
  %s1 = inlined_call_operand.vmem [shape: f32[128,128], index: 1, kind: input, shape index: {}]
  %s2 = inlined_call_operand.vmem [shape: bf16[128,128], index: 2, kind: input, shape index: {}]
  %s3 = inlined_call_operand.vmem [shape: f32[128,128], index: 3, kind: input, shape index: {}]
  %s4 = inlined_call_operand.vmem [shape: f32[1,128], index: 4, kind: input, shape index: {}]
  %s5 = inlined_call_operand.hbm [shape: f32[4,128,128], index: 5, kind: input, shape index: {}]
  %s6 = inlined_call_operand.vmem [shape: f32[4,1,128], index: 6, kind: input, shape index: {}]
  %s7 = inlined_call_operand.vmem [shape: f32[2,1,128], index: 7, kind: input, shape index: {}]
  %s8 = inlined_call_operand.vmem [shape: f32[2,1,128], index: 8, kind: input, shape index: {}]
  %s9 = inlined_call_operand.hbm [shape: f32[3,128,128], index: 9, kind: input, shape index: {}]
  %s10 = inlined_call_operand.vmem [shape: f32[3,1,128], index: 10, kind: input, shape index: {}]
  %s11 = inlined_call_operand.vmem [shape: f32[128,128], index: 11, kind: output, shape index: {}]
  %s12 = sld [smem:[#allocation0]]
  $region66: #{ginnet_forward.1} parent=0
    _
  %s14 = ssub.s32 1, %s12
  %s15 = scalar_select 0, %s14, %s12
  $region1: #{ginnet_forward.1} parent=0
    #allocation2 [shape = 'u8[512]{0}', space=smem, size = 0x200, scoped, tag = 'input window, operand 0, single buffered']
    #allocation3 [shape = 's32[1]{0}', space=sflag, size = 0x4, scoped, tag = 'scoped memory for ginnet_forward.1']
    #allocation4 [shape = 's32[1]{0}', space=sflag, size = 0x4, scoped, tag = 'scoped memory for ginnet_forward.1']
    #allocation5 [shape = 'u8[262144]{0}', space=vmem, size = 0x40000, scoped, tag = 'input window, operand 5, single buffered']
    #allocation6 [shape = 'u8[196608]{0}', space=vmem, size = 0x30000, scoped, tag = 'input window, operand 9, single buffered']
    #allocation7 [shape = 's32[1]{0}', space=sflag, size = 0x4, scoped, tag = 'scoped memory for ginnet_forward.1']
    %16 = vsyncpa [#allocation4], 0
    %17 = vsyncpa [#allocation3], 0
    %18 = vsyncpa [#allocation7], 0
    // Predicated region
    $region2: #{ginnet_forward.1} parent=1 // pred_check
      _
    $region3: #{ginnet_forward.1} parent=1 // pred_check_branch
      %20 = sbr.rel (0) target = $region5
    $region4: #{ginnet_forward.1} parent=1 // pred_region
      %s22 = ssub.s32 16, 16
      %23 = vsyncadd [#allocation4], %s22
      %s25 = sshll.u32 %s0, 4
      %s26 = int_to_ptr.vmem [resolvable:$true] %s25
      %28 = dma.vmem_to_smem %s26, 16, [#allocation2], [#allocation4]
    $region5: #{ginnet_forward.1} parent=1 // pred_fallthru
      _
    // Predicated region
    $region6: #{ginnet_forward.1} parent=1 // pred_check
      _
    $region7: #{ginnet_forward.1} parent=1 // pred_check_branch
      %30 = sbr.rel (0) target = $region9
    $region8: #{ginnet_forward.1} parent=1 // pred_region
      _
    $region9: #{ginnet_forward.1} parent=1 // pred_fallthru
      _
    // Predicated region
    $region10: #{ginnet_forward.1} parent=1 // pred_check
      _
    $region11: #{ginnet_forward.1} parent=1 // pred_check_branch
      %32 = sbr.rel (0) target = $region13
    $region12: #{ginnet_forward.1} parent=1 // pred_region
      _
    $region13: #{ginnet_forward.1} parent=1 // pred_fallthru
      _
    // Predicated region
    $region14: #{ginnet_forward.1} parent=1 // pred_check
      _
    $region15: #{ginnet_forward.1} parent=1 // pred_check_branch
      %34 = sbr.rel (0) target = $region17
    $region16: #{ginnet_forward.1} parent=1 // pred_region
      _
    $region17: #{ginnet_forward.1} parent=1 // pred_fallthru
      _
    // Predicated region
    $region18: #{ginnet_forward.1} parent=1 // pred_check
      _
    $region19: #{ginnet_forward.1} parent=1 // pred_check_branch
      %36 = sbr.rel (0) target = $region21
    $region20: #{ginnet_forward.1} parent=1 // pred_region
      _
    $region21: #{ginnet_forward.1} parent=1 // pred_fallthru
      _
    // Predicated region
    $region22: #{ginnet_forward.1} parent=1 // pred_check
      _
    $region23: #{ginnet_forward.1} parent=1 // pred_check_branch
      %38 = sbr.rel (0) target = $region25
    $region24: #{ginnet_forward.1} parent=1 // pred_region
      %s40 = ssub.s32 8192, 8192
      %41 = vsyncadd [#allocation3], %s40
      %s42 = sshll.u32 [#allocation5], 4
      %s43 = int_to_ptr.vmem [resolvable:$true] %s42
      %48 = dma.hbm_to_vmem [thread:$0]  %s5, 8192, %s43, [#allocation3], 128, 128, 8
    $region25: #{ginnet_forward.1} parent=1 // pred_fallthru
      _
    // Predicated region
    $region26: #{ginnet_forward.1} parent=1 // pred_check
      _
    $region27: #{ginnet_forward.1} parent=1 // pred_check_branch
      %50 = sbr.rel (0) target = $region29
    $region28: #{ginnet_forward.1} parent=1 // pred_region
      _
    $region29: #{ginnet_forward.1} parent=1 // pred_fallthru
      _
    // Predicated region
    $region30: #{ginnet_forward.1} parent=1 // pred_check
      _
    $region31: #{ginnet_forward.1} parent=1 // pred_check_branch
      %52 = sbr.rel (0) target = $region33
    $region32: #{ginnet_forward.1} parent=1 // pred_region
      _
    $region33: #{ginnet_forward.1} parent=1 // pred_fallthru
      _
    // Predicated region
    $region34: #{ginnet_forward.1} parent=1 // pred_check
      _
    $region35: #{ginnet_forward.1} parent=1 // pred_check_branch
      %54 = sbr.rel (0) target = $region37
    $region36: #{ginnet_forward.1} parent=1 // pred_region
      _
    $region37: #{ginnet_forward.1} parent=1 // pred_fallthru
      _
    // Predicated region
    $region38: #{ginnet_forward.1} parent=1 // pred_check
      _
    $region39: #{ginnet_forward.1} parent=1 // pred_check_branch
      %56 = sbr.rel (0) target = $region41
    $region40: #{ginnet_forward.1} parent=1 // pred_region
      %s58 = ssub.s32 6144, 6144
      %59 = vsyncadd [#allocation7], %s58
      %s60 = sshll.u32 [#allocation6], 4
      %s61 = int_to_ptr.vmem [resolvable:$true] %s60
      %66 = dma.hbm_to_vmem [thread:$0]  %s9, 6144, %s61, [#allocation7], 128, 128, 8
    $region41: #{ginnet_forward.1} parent=1 // pred_fallthru
      _
    // Predicated region
    $region42: #{ginnet_forward.1} parent=1 // pred_check
      _
    $region43: #{ginnet_forward.1} parent=1 // pred_check_branch
      %68 = sbr.rel (0) target = $region45
    $region44: #{ginnet_forward.1} parent=1 // pred_region
      _
    $region45: #{ginnet_forward.1} parent=1 // pred_fallthru
      _
    // Predicated region
    $region46: #{ginnet_forward.1} parent=1 // pred_check
      _
    $region47: #{ginnet_forward.1} parent=1 // pred_check_branch
      %70 = sbr.rel (0) target = $region49
    $region48: #{ginnet_forward.1} parent=1 // pred_region
      %71 = dma.done [#allocation4], 16
    $region49: #{ginnet_forward.1} parent=1 // pred_fallthru
      _
    // Predicated region
    $region50: #{ginnet_forward.1} parent=1 // pred_check
      _
    $region51: #{ginnet_forward.1} parent=1 // pred_check_branch
      %73 = sbr.rel (0) target = $region53
    $region52: #{ginnet_forward.1} parent=1 // pred_region
      %74 = dma.done [#allocation3], 8192
    $region53: #{ginnet_forward.1} parent=1 // pred_fallthru
      _
    // Predicated region
    $region54: #{ginnet_forward.1} parent=1 // pred_check
      _
    $region55: #{ginnet_forward.1} parent=1 // pred_check_branch
      %76 = sbr.rel (0) target = $region57
    $region56: #{ginnet_forward.1} parent=1 // pred_region
      %77 = dma.done [#allocation7], 6144
    $region57: #{ginnet_forward.1} parent=1 // pred_fallthru
      _
    %78 = sfence
    %v80 = vld [vmem:[%s1] sm:$0xff]
    %v81 = vld [vmem:[%s1 + $0x8] sm:$0xff]
    %v82 = vld [vmem:[%s1 + $0x10] sm:$0xff]
    %v83 = vld [vmem:[%s1 + $0x18] sm:$0xff]
    %v84 = vld [vmem:[%s1 + $0x20] sm:$0xff]
    %v85 = vld [vmem:[%s1 + $0x28] sm:$0xff]
    %v86 = vld [vmem:[%s1 + $0x30] sm:$0xff]
    %v87 = vld [vmem:[%s1 + $0x38] sm:$0xff]
    %v88 = vld [vmem:[%s1 + $0x40] sm:$0xff]
    %v89 = vld [vmem:[%s1 + $0x48] sm:$0xff]
    %v90 = vld [vmem:[%s1 + $0x50] sm:$0xff]
    %v91 = vld [vmem:[%s1 + $0x58] sm:$0xff]
    %v92 = vld [vmem:[%s1 + $0x60] sm:$0xff]
    %v93 = vld [vmem:[%s1 + $0x68] sm:$0xff]
    %v94 = vld [vmem:[%s1 + $0x70] sm:$0xff]
    %v95 = vld [vmem:[%s1 + $0x78] sm:$0xff]
    %v96 = vld [vmem:[%s3] sm:$0xff]
    %v97 = vld [vmem:[%s3 + $0x8] sm:$0xff]
    %v98 = vld [vmem:[%s3 + $0x10] sm:$0xff]
    %v99 = vld [vmem:[%s3 + $0x18] sm:$0xff]
    %v100 = vld [vmem:[%s3 + $0x20] sm:$0xff]
    %v101 = vld [vmem:[%s3 + $0x28] sm:$0xff]
    %v102 = vld [vmem:[%s3 + $0x30] sm:$0xff]
    %v103 = vld [vmem:[%s3 + $0x38] sm:$0xff]
    %v104 = vld [vmem:[%s3 + $0x40] sm:$0xff]
    %v105 = vld [vmem:[%s3 + $0x48] sm:$0xff]
    %v106 = vld [vmem:[%s3 + $0x50] sm:$0xff]
    %v107 = vld [vmem:[%s3 + $0x58] sm:$0xff]
    %v108 = vld [vmem:[%s3 + $0x60] sm:$0xff]
    %v109 = vld [vmem:[%s3 + $0x68] sm:$0xff]
    %v110 = vld [vmem:[%s3 + $0x70] sm:$0xff]
    %v111 = vld [vmem:[%s3 + $0x78] sm:$0xff]
    %v112 = vld [vmem:[%s4] sm:$0x1]
    %v114 = vlaneseq
    %v115 = vshrl.u32 %v114, 7
    %v116 = vsub.s32 0, %v115
    %v117 = vrot.slane %v112, %v116
    %119 = vmatprep.subr.mxu0 0.0
    %120 = vmatpush1.msra.mxu0 %v96
    %121 = vmatprep.subr.mxu0 0.0
    %122 = vmatpush1.msra.mxu0 %v97
    %123 = vmatprep.subr.mxu0 0.0
    %124 = vmatpush1.msra.mxu0 %v98
    %125 = vmatprep.subr.mxu0 0.0
    %126 = vmatpush1.msra.mxu0 %v99
    %127 = vmatprep.subr.mxu0 0.0
    %128 = vmatpush1.msra.mxu0 %v100
    %129 = vmatprep.subr.mxu0 0.0
    %130 = vmatpush1.msra.mxu0 %v101
    %131 = vmatprep.subr.mxu0 0.0
    %132 = vmatpush1.msra.mxu0 %v102
    %133 = vmatprep.subr.mxu0 0.0
    %134 = vmatpush1.msra.mxu0 %v103
    %135 = vmatprep.subr.mxu0 0.0
    %136 = vmatpush1.msra.mxu0 %v104
    %137 = vmatprep.subr.mxu0 0.0
    %138 = vmatpush1.msra.mxu0 %v105
    %139 = vmatprep.subr.mxu0 0.0
    %140 = vmatpush1.msra.mxu0 %v106
    %141 = vmatprep.subr.mxu0 0.0
    %142 = vmatpush1.msra.mxu0 %v107
    %143 = vmatprep.subr.mxu0 0.0
    %144 = vmatpush1.msra.mxu0 %v108
    %145 = vmatprep.subr.mxu0 0.0
    %146 = vmatpush1.msra.mxu0 %v109
    %147 = vmatprep.subr.mxu0 0.0
    %148 = vmatpush1.msra.mxu0 %v110
    %149 = vmatprep.subr.mxu0 0.0
    %150 = vmatpush1.msra.mxu0 %v111
    %151 = vmatprep.subr.mxu0 0.0
    %152 = vmatpush1.msra.mxu0 0.0
    %153 = vmatprep.subr.mxu0 0.0
    %154 = vmatpush1.msra.mxu0 0.0
    %155 = vmatprep.subr.mxu0 0.0
    %156 = vmatpush1.msra.mxu0 0.0
    %157 = vmatprep.subr.mxu0 0.0
    %158 = vmatpush1.msra.mxu0 0.0
    %159 = vmatprep.subr.mxu0 0.0
    %160 = vmatpush1.msra.mxu0 0.0
    %161 = vmatprep.subr.mxu0 0.0
    %162 = vmatpush1.msra.mxu0 0.0
    %163 = vmatprep.subr.mxu0 0.0
    %164 = vmatpush1.msra.mxu0 0.0
    %165 = vmatprep.subr.mxu0 0.0
    %166 = vmatpush1.msra.mxu0 0.0
    %167 = vmatprep.subr.mxu0 0.0
    %168 = vmatpush1.msra.mxu0 0.0
    %169 = vmatprep.subr.mxu0 0.0
    %170 = vmatpush1.msra.mxu0 0.0
    %171 = vmatprep.subr.mxu0 0.0
    %172 = vmatpush1.msra.mxu0 0.0
    %173 = vmatprep.subr.mxu0 0.0
    %174 = vmatpush1.msra.mxu0 0.0
    %175 = vmatprep.subr.mxu0 0.0
    %176 = vmatpush1.msra.mxu0 0.0
    %177 = vmatprep.subr.mxu0 0.0
    %178 = vmatpush1.msra.mxu0 0.0
    %179 = vmatprep.subr.mxu0 0.0
    %180 = vmatpush1.msra.mxu0 0.0
    %181 = vmatprep.subr.mxu0 0.0
    %182 = vmatpush1.msra.mxu0 0.0
    %183 = vmatprep.mubr.f32.mxu0 0.0
    %184 = vmatmul.mubr.f32.gmra.mrb[0].mxu0 %v80
    %v185 = vpop.f32.mrb[0].mxu0
    %v186 = vadd.f32 %v117, %v185
    %v187 = vpop.f32.mrb[0].mxu0
    %188 = vmatprep.mubr.f32.mxu0 0.0
    %189 = vmatmul.mubr.f32.gmra.mrb[0].mxu0 %v81
    %v190 = vpop.f32.mrb[0].mxu0
    %v191 = vadd.f32 %v117, %v190
    %v192 = vpop.f32.mrb[0].mxu0
    %193 = vmatprep.mubr.f32.mxu0 0.0
    %194 = vmatmul.mubr.f32.gmra.mrb[0].mxu0 %v82
    %v195 = vpop.f32.mrb[0].mxu0
    %v196 = vadd.f32 %v117, %v195
    %v197 = vpop.f32.mrb[0].mxu0
    %198 = vmatprep.mubr.f32.mxu0 0.0
    %199 = vmatmul.mubr.f32.gmra.mrb[0].mxu0 %v83
    %v200 = vpop.f32.mrb[0].mxu0
    %v201 = vadd.f32 %v117, %v200
    %v202 = vpop.f32.mrb[0].mxu0
    %203 = vmatprep.mubr.f32.mxu0 0.0
    %204 = vmatmul.mubr.f32.gmra.mrb[0].mxu0 %v84
    %v205 = vpop.f32.mrb[0].mxu0
    %v206 = vadd.f32 %v117, %v205
    %v207 = vpop.f32.mrb[0].mxu0
    %208 = vmatprep.mubr.f32.mxu0 0.0
    %209 = vmatmul.mubr.f32.gmra.mrb[0].mxu0 %v85
    %v210 = vpop.f32.mrb[0].mxu0
    %v211 = vadd.f32 %v117, %v210
    %v212 = vpop.f32.mrb[0].mxu0
    %213 = vmatprep.mubr.f32.mxu0 0.0
    %214 = vmatmul.mubr.f32.gmra.mrb[0].mxu0 %v86
    %v215 = vpop.f32.mrb[0].mxu0
    %v216 = vadd.f32 %v117, %v215
    %v217 = vpop.f32.mrb[0].mxu0
    %218 = vmatprep.mubr.f32.mxu0 0.0
    %219 = vmatmul.mubr.f32.gmra.mrb[0].mxu0 %v87
    %v220 = vpop.f32.mrb[0].mxu0
    %v221 = vadd.f32 %v117, %v220
    %v222 = vpop.f32.mrb[0].mxu0
    %223 = vmatprep.mubr.f32.mxu0 0.0
    %224 = vmatmul.mubr.f32.gmra.mrb[0].mxu0 %v88
    %v225 = vpop.f32.mrb[0].mxu0
    %v226 = vadd.f32 %v117, %v225
    %v227 = vpop.f32.mrb[0].mxu0
    %228 = vmatprep.mubr.f32.mxu0 0.0
    %229 = vmatmul.mubr.f32.gmra.mrb[0].mxu0 %v89
    %v230 = vpop.f32.mrb[0].mxu0
    %v231 = vadd.f32 %v117, %v230
    %v232 = vpop.f32.mrb[0].mxu0
    %233 = vmatprep.mubr.f32.mxu0 0.0
    %234 = vmatmul.mubr.f32.gmra.mrb[0].mxu0 %v90
    %v235 = vpop.f32.mrb[0].mxu0
    %v236 = vadd.f32 %v117, %v235
    %v237 = vpop.f32.mrb[0].mxu0
    %238 = vmatprep.mubr.f32.mxu0 0.0
    %239 = vmatmul.mubr.f32.gmra.mrb[0].mxu0 %v91
    %v240 = vpop.f32.mrb[0].mxu0
    %v241 = vadd.f32 %v117, %v240
    %v242 = vpop.f32.mrb[0].mxu0
    %243 = vmatprep.mubr.f32.mxu0 0.0
    %244 = vmatmul.mubr.f32.gmra.mrb[0].mxu0 %v92
    %v245 = vpop.f32.mrb[0].mxu0
    %v246 = vadd.f32 %v117, %v245
    %v247 = vpop.f32.mrb[0].mxu0
    %248 = vmatprep.mubr.f32.mxu0 0.0
    %249 = vmatmul.mubr.f32.gmra.mrb[0].mxu0 %v93
    %v250 = vpop.f32.mrb[0].mxu0
    %v251 = vadd.f32 %v117, %v250
    %v252 = vpop.f32.mrb[0].mxu0
    %253 = vmatprep.mubr.f32.mxu0 0.0
    %254 = vmatmul.mubr.f32.gmra.mrb[0].mxu0 %v94
    %v255 = vpop.f32.mrb[0].mxu0
    %v256 = vadd.f32 %v117, %v255
    %v257 = vpop.f32.mrb[0].mxu0
    %258 = vmatprep.mubr.f32.mxu0 0.0
    %259 = vmatmul.mubr.f32.gmra.mrb[0].mxu0 %v95
    %v260 = vpop.f32.mrb[0].mxu0
    %v261 = vadd.f32 %v117, %v260
    %v262 = vpop.f32.mrb[0].mxu0
    %263 = vdwg.mxu0
    %v264 = vld [vmem:[#allocation6] sm:$0xff]
    %v265 = vld [vmem:[#allocation6 + $0x8] sm:$0xff]
    %v266 = vld [vmem:[#allocation6 + $0x10] sm:$0xff]
    %v267 = vld [vmem:[#allocation6 + $0x18] sm:$0xff]
    %v268 = vld [vmem:[#allocation6 + $0x20] sm:$0xff]
    %v269 = vld [vmem:[#allocation6 + $0x28] sm:$0xff]
    %v270 = vld [vmem:[#allocation6 + $0x30] sm:$0xff]
    %v271 = vld [vmem:[#allocation6 + $0x38] sm:$0xff]
    %v272 = vld [vmem:[#allocation6 + $0x40] sm:$0xff]
    %v273 = vld [vmem:[#allocation6 + $0x48] sm:$0xff]
    %v274 = vld [vmem:[#allocation6 + $0x50] sm:$0xff]
    %v275 = vld [vmem:[#allocation6 + $0x58] sm:$0xff]
    %v276 = vld [vmem:[#allocation6 + $0x60] sm:$0xff]
    %v277 = vld [vmem:[#allocation6 + $0x68] sm:$0xff]
    %v278 = vld [vmem:[#allocation6 + $0x70] sm:$0xff]
    %v279 = vld [vmem:[#allocation6 + $0x78] sm:$0xff]
    %v280 = vld [vmem:[%s10] sm:$0x1]
    %v282 = vlaneseq
    %v283 = vshrl.u32 %v282, 7
    %v284 = vsub.s32 0, %v283
    %v285 = vrot.slane %v280, %v284
    %287 = vmatprep.subr.mxu0 0.0
    %288 = vmatpush1.msra.mxu0 %v264
    %289 = vmatprep.subr.mxu0 0.0
    %290 = vmatpush1.msra.mxu0 %v265
    %291 = vmatprep.subr.mxu0 0.0
    %292 = vmatpush1.msra.mxu0 %v266
    %293 = vmatprep.subr.mxu0 0.0
    %294 = vmatpush1.msra.mxu0 %v267
    %295 = vmatprep.subr.mxu0 0.0
    %296 = vmatpush1.msra.mxu0 %v268
    %297 = vmatprep.subr.mxu0 0.0
    %298 = vmatpush1.msra.mxu0 %v269
    %299 = vmatprep.subr.mxu0 0.0
    %300 = vmatpush1.msra.mxu0 %v270
    %301 = vmatprep.subr.mxu0 0.0
    %302 = vmatpush1.msra.mxu0 %v271
    %303 = vmatprep.subr.mxu0 0.0
    %304 = vmatpush1.msra.mxu0 %v272
    %305 = vmatprep.subr.mxu0 0.0
    %306 = vmatpush1.msra.mxu0 %v273
    %307 = vmatprep.subr.mxu0 0.0
    %308 = vmatpush1.msra.mxu0 %v274
    %309 = vmatprep.subr.mxu0 0.0
    %310 = vmatpush1.msra.mxu0 %v275
    %311 = vmatprep.subr.mxu0 0.0
    %312 = vmatpush1.msra.mxu0 %v276
    %313 = vmatprep.subr.mxu0 0.0
    %314 = vmatpush1.msra.mxu0 %v277
    %315 = vmatprep.subr.mxu0 0.0
    %316 = vmatpush1.msra.mxu0 %v278
    %317 = vmatprep.subr.mxu0 0.0
    %318 = vmatpush1.msra.mxu0 %v279
    %319 = vmatprep.subr.mxu0 0.0
    %320 = vmatpush1.msra.mxu0 0.0
    %321 = vmatprep.subr.mxu0 0.0
    %322 = vmatpush1.msra.mxu0 0.0
    %323 = vmatprep.subr.mxu0 0.0
    %324 = vmatpush1.msra.mxu0 0.0
    %325 = vmatprep.subr.mxu0 0.0
    %326 = vmatpush1.msra.mxu0 0.0
    %327 = vmatprep.subr.mxu0 0.0
    %328 = vmatpush1.msra.mxu0 0.0
    %329 = vmatprep.subr.mxu0 0.0
    %330 = vmatpush1.msra.mxu0 0.0
    %331 = vmatprep.subr.mxu0 0.0
    %332 = vmatpush1.msra.mxu0 0.0
    %333 = vmatprep.subr.mxu0 0.0
    %334 = vmatpush1.msra.mxu0 0.0
    %335 = vmatprep.subr.mxu0 0.0
    %336 = vmatpush1.msra.mxu0 0.0
    %337 = vmatprep.subr.mxu0 0.0
    %338 = vmatpush1.msra.mxu0 0.0
    %339 = vmatprep.subr.mxu0 0.0
    %340 = vmatpush1.msra.mxu0 0.0
    %341 = vmatprep.subr.mxu0 0.0
    %342 = vmatpush1.msra.mxu0 0.0
    %343 = vmatprep.subr.mxu0 0.0
    %344 = vmatpush1.msra.mxu0 0.0
    %345 = vmatprep.subr.mxu0 0.0
    %346 = vmatpush1.msra.mxu0 0.0
    %347 = vmatprep.subr.mxu0 0.0
    %348 = vmatpush1.msra.mxu0 0.0
    %349 = vmatprep.subr.mxu0 0.0
    %350 = vmatpush1.msra.mxu0 0.0
    %351 = vmatprep.mubr.f32.mxu0 0.0
    %352 = vmatmul.mubr.f32.gmra.mrb[0].mxu0 %v186
    %v353 = vpop.f32.mrb[0].mxu0
    %v354 = vadd.f32 %v285, %v353
    %v355 = vpop.f32.mrb[0].mxu0
    %356 = vmatprep.mubr.f32.mxu0 0.0
    %357 = vmatmul.mubr.f32.gmra.mrb[0].mxu0 %v191
    %v358 = vpop.f32.mrb[0].mxu0
    %v359 = vadd.f32 %v285, %v358
    %v360 = vpop.f32.mrb[0].mxu0
    %361 = vmatprep.mubr.f32.mxu0 0.0
    %362 = vmatmul.mubr.f32.gmra.mrb[0].mxu0 %v196
    %v363 = vpop.f32.mrb[0].mxu0
    %v364 = vadd.f32 %v285, %v363
    %v365 = vpop.f32.mrb[0].mxu0
    %366 = vmatprep.mubr.f32.mxu0 0.0
    %367 = vmatmul.mubr.f32.gmra.mrb[0].mxu0 %v201
    %v368 = vpop.f32.mrb[0].mxu0
    %v369 = vadd.f32 %v285, %v368
    %v370 = vpop.f32.mrb[0].mxu0
    %371 = vmatprep.mubr.f32.mxu0 0.0
    %372 = vmatmul.mubr.f32.gmra.mrb[0].mxu0 %v206
    %v373 = vpop.f32.mrb[0].mxu0
    %v374 = vadd.f32 %v285, %v373
    %v375 = vpop.f32.mrb[0].mxu0
    %376 = vmatprep.mubr.f32.mxu0 0.0
    %377 = vmatmul.mubr.f32.gmra.mrb[0].mxu0 %v211
    %v378 = vpop.f32.mrb[0].mxu0
    %v379 = vadd.f32 %v285, %v378
    %v380 = vpop.f32.mrb[0].mxu0
    %381 = vmatprep.mubr.f32.mxu0 0.0
    %382 = vmatmul.mubr.f32.gmra.mrb[0].mxu0 %v216
    %v383 = vpop.f32.mrb[0].mxu0
    %v384 = vadd.f32 %v285, %v383
    %v385 = vpop.f32.mrb[0].mxu0
    %386 = vmatprep.mubr.f32.mxu0 0.0
    %387 = vmatmul.mubr.f32.gmra.mrb[0].mxu0 %v221
    %v388 = vpop.f32.mrb[0].mxu0
    %v389 = vadd.f32 %v285, %v388
    %v390 = vpop.f32.mrb[0].mxu0
    %391 = vmatprep.mubr.f32.mxu0 0.0
    %392 = vmatmul.mubr.f32.gmra.mrb[0].mxu0 %v226
    %v393 = vpop.f32.mrb[0].mxu0
    %v394 = vadd.f32 %v285, %v393
    %v395 = vpop.f32.mrb[0].mxu0
    %396 = vmatprep.mubr.f32.mxu0 0.0
    %397 = vmatmul.mubr.f32.gmra.mrb[0].mxu0 %v231
    %v398 = vpop.f32.mrb[0].mxu0
    %v399 = vadd.f32 %v285, %v398
    %v400 = vpop.f32.mrb[0].mxu0
    %401 = vmatprep.mubr.f32.mxu0 0.0
    %402 = vmatmul.mubr.f32.gmra.mrb[0].mxu0 %v236
    %v403 = vpop.f32.mrb[0].mxu0
    %v404 = vadd.f32 %v285, %v403
    %v405 = vpop.f32.mrb[0].mxu0
    %406 = vmatprep.mubr.f32.mxu0 0.0
    %407 = vmatmul.mubr.f32.gmra.mrb[0].mxu0 %v241
    %v408 = vpop.f32.mrb[0].mxu0
    %v409 = vadd.f32 %v285, %v408
    %v410 = vpop.f32.mrb[0].mxu0
    %411 = vmatprep.mubr.f32.mxu0 0.0
    %412 = vmatmul.mubr.f32.gmra.mrb[0].mxu0 %v246
    %v413 = vpop.f32.mrb[0].mxu0
    %v414 = vadd.f32 %v285, %v413
    %v415 = vpop.f32.mrb[0].mxu0
    %416 = vmatprep.mubr.f32.mxu0 0.0
    %417 = vmatmul.mubr.f32.gmra.mrb[0].mxu0 %v251
    %v418 = vpop.f32.mrb[0].mxu0
    %v419 = vadd.f32 %v285, %v418
    %v420 = vpop.f32.mrb[0].mxu0
    %421 = vmatprep.mubr.f32.mxu0 0.0
    %422 = vmatmul.mubr.f32.gmra.mrb[0].mxu0 %v256
    %v423 = vpop.f32.mrb[0].mxu0
    %v424 = vadd.f32 %v285, %v423
    %v425 = vpop.f32.mrb[0].mxu0
    %426 = vmatprep.mubr.f32.mxu0 0.0
    %427 = vmatmul.mubr.f32.gmra.mrb[0].mxu0 %v261
    %v428 = vpop.f32.mrb[0].mxu0
    %v429 = vadd.f32 %v285, %v428
    %v430 = vpop.f32.mrb[0].mxu0
    %431 = vdwg.mxu0
    %v432 = vld [vmem:[%s2] sm:$0xf]
    %v433 = vld [vmem:[%s2 + $0x4] sm:$0xf]
    %v434 = vld [vmem:[%s2 + $0x8] sm:$0xf]
    %v435 = vld [vmem:[%s2 + $0xc] sm:$0xf]
    %v436 = vld [vmem:[%s2 + $0x10] sm:$0xf]
    %v437 = vld [vmem:[%s2 + $0x14] sm:$0xf]
    %v438 = vld [vmem:[%s2 + $0x18] sm:$0xf]
    %v439 = vld [vmem:[%s2 + $0x1c] sm:$0xf]
    %v440 = vld [vmem:[%s2 + $0x20] sm:$0xf]
    %v441 = vld [vmem:[%s2 + $0x24] sm:$0xf]
    %v442 = vld [vmem:[%s2 + $0x28] sm:$0xf]
    %v443 = vld [vmem:[%s2 + $0x2c] sm:$0xf]
    %v444 = vld [vmem:[%s2 + $0x30] sm:$0xf]
    %v445 = vld [vmem:[%s2 + $0x34] sm:$0xf]
    %v446 = vld [vmem:[%s2 + $0x38] sm:$0xf]
    %v447 = vld [vmem:[%s2 + $0x3c] sm:$0xf]
    %v448 = vpack.c.bf16 %v191, %v186
    %v449 = vpack.c.bf16 %v201, %v196
    %v450 = vpack.c.bf16 %v211, %v206
    %v451 = vpack.c.bf16 %v221, %v216
    %v452 = vpack.c.bf16 %v231, %v226
    %v453 = vpack.c.bf16 %v241, %v236
    %v454 = vpack.c.bf16 %v251, %v246
    %v455 = vpack.c.bf16 %v261, %v256
    %v472 = vunpack.c.l.b16 %v432
    %v473 = vunpack.c.l.b16 %v433
    %v474 = vunpack.c.l.b16 %v434
    %v475 = vunpack.c.l.b16 %v435
    %v476 = vunpack.c.l.b16 %v436
    %v477 = vunpack.c.l.b16 %v437
    %v478 = vunpack.c.l.b16 %v438
    %v479 = vunpack.c.l.b16 %v439
    %v480 = vunpack.c.l.b16 %v440
    %v481 = vunpack.c.l.b16 %v441
    %v482 = vunpack.c.l.b16 %v442
    %v483 = vunpack.c.l.b16 %v443
    %v484 = vunpack.c.l.b16 %v444
    %v485 = vunpack.c.l.b16 %v445
    %v486 = vunpack.c.l.b16 %v446
    %v487 = vunpack.c.l.b16 %v447
    %v488 = vpack.c.b16 %v473, %v472
    %v489 = vpack.c.b16 %v475, %v474
    %v490 = vpack.c.b16 %v477, %v476
    %v491 = vpack.c.b16 %v479, %v478
    %v492 = vpack.c.b16 %v481, %v480
    %v493 = vpack.c.b16 %v483, %v482
    %v494 = vpack.c.b16 %v485, %v484
    %v495 = vpack.c.b16 %v487, %v486
    %504 = vmatprep.subr.bf16.mxu0 0
    %505 = vmatpush1.bf16.msra.mxu0 %v448
    %506 = vmatprep.subr.bf16.mxu0 0
    %507 = vmatpush1.bf16.msra.mxu0 %v449
    %508 = vmatprep.subr.bf16.mxu0 0
    %509 = vmatpush1.bf16.msra.mxu0 %v450
    %510 = vmatprep.subr.bf16.mxu0 0
    %511 = vmatpush1.bf16.msra.mxu0 %v451
    %512 = vmatprep.subr.bf16.mxu0 0
    %513 = vmatpush1.bf16.msra.mxu0 %v452
    %514 = vmatprep.subr.bf16.mxu0 0
    %515 = vmatpush1.bf16.msra.mxu0 %v453
    %516 = vmatprep.subr.bf16.mxu0 0
    %517 = vmatpush1.bf16.msra.mxu0 %v454
    %518 = vmatprep.subr.bf16.mxu0 0
    %519 = vmatpush1.bf16.msra.mxu0 %v455
    %520 = vmatprep.subr.bf16.mxu0 0
    %521 = vmatpush1.bf16.msra.mxu0 0
    %522 = vmatprep.subr.bf16.mxu0 0
    %523 = vmatpush1.bf16.msra.mxu0 0
    %524 = vmatprep.subr.bf16.mxu0 0
    %525 = vmatpush1.bf16.msra.mxu0 0
    %526 = vmatprep.subr.bf16.mxu0 0
    %527 = vmatpush1.bf16.msra.mxu0 0
    %528 = vmatprep.subr.bf16.mxu0 0
    %529 = vmatpush1.bf16.msra.mxu0 0
    %530 = vmatprep.subr.bf16.mxu0 0
    %531 = vmatpush1.bf16.msra.mxu0 0
    %532 = vmatprep.subr.bf16.mxu0 0
    %533 = vmatpush1.bf16.msra.mxu0 0
    %534 = vmatprep.subr.bf16.mxu0 0
    %535 = vmatpush1.bf16.msra.mxu0 0
    %536 = vmatprep.mubr.bf16.mxu0 0
    %537 = vmatmul.mubr.bf16.gmra.mrb[0].mxu0 %v488
    %v538 = vpop.f32.mrb[0].mxu0
    %v539 = vadd.f32 0.0, %v538
    %v540 = vpop.f32.mrb[0].mxu0
    %v541 = vpop.f32.mrb[0].mxu0
    %v542 = vadd.f32 0.0, %v541
    %v543 = vpop.f32.mrb[0].mxu0
    %544 = vmatprep.mubr.bf16.mxu0 0
    %545 = vmatmul.mubr.bf16.gmra.mrb[0].mxu0 %v489
    %v546 = vpop.f32.mrb[0].mxu0
    %v547 = vadd.f32 0.0, %v546
    %v548 = vpop.f32.mrb[0].mxu0
    %v549 = vpop.f32.mrb[0].mxu0
    %v550 = vadd.f32 0.0, %v549
    %v551 = vpop.f32.mrb[0].mxu0
    %552 = vmatprep.mubr.bf16.mxu0 0
    %553 = vmatmul.mubr.bf16.gmra.mrb[0].mxu0 %v490
    %v554 = vpop.f32.mrb[0].mxu0
    %v555 = vadd.f32 0.0, %v554
    %v556 = vpop.f32.mrb[0].mxu0
    %v557 = vpop.f32.mrb[0].mxu0
    %v558 = vadd.f32 0.0, %v557
    %v559 = vpop.f32.mrb[0].mxu0
    %560 = vmatprep.mubr.bf16.mxu0 0
    %561 = vmatmul.mubr.bf16.gmra.mrb[0].mxu0 %v491
    %v562 = vpop.f32.mrb[0].mxu0
    %v563 = vadd.f32 0.0, %v562
    %v564 = vpop.f32.mrb[0].mxu0
    %v565 = vpop.f32.mrb[0].mxu0
    %v566 = vadd.f32 0.0, %v565
    %v567 = vpop.f32.mrb[0].mxu0
    %568 = vmatprep.mubr.bf16.mxu0 0
    %569 = vmatmul.mubr.bf16.gmra.mrb[0].mxu0 %v492
    %v570 = vpop.f32.mrb[0].mxu0
    %v571 = vadd.f32 0.0, %v570
    %v572 = vpop.f32.mrb[0].mxu0
    %v573 = vpop.f32.mrb[0].mxu0
    %v574 = vadd.f32 0.0, %v573
    %v575 = vpop.f32.mrb[0].mxu0
    %576 = vmatprep.mubr.bf16.mxu0 0
    %577 = vmatmul.mubr.bf16.gmra.mrb[0].mxu0 %v493
    %v578 = vpop.f32.mrb[0].mxu0
    %v579 = vadd.f32 0.0, %v578
    %v580 = vpop.f32.mrb[0].mxu0
    %v581 = vpop.f32.mrb[0].mxu0
    %v582 = vadd.f32 0.0, %v581
    %v583 = vpop.f32.mrb[0].mxu0
    %584 = vmatprep.mubr.bf16.mxu0 0
    %585 = vmatmul.mubr.bf16.gmra.mrb[0].mxu0 %v494
    %v586 = vpop.f32.mrb[0].mxu0
    %v587 = vadd.f32 0.0, %v586
    %v588 = vpop.f32.mrb[0].mxu0
    %v589 = vpop.f32.mrb[0].mxu0
    %v590 = vadd.f32 0.0, %v589
    %v591 = vpop.f32.mrb[0].mxu0
    %592 = vmatprep.mubr.bf16.mxu0 0
    %593 = vmatmul.mubr.bf16.gmra.mrb[0].mxu0 %v495
    %v594 = vpop.f32.mrb[0].mxu0
    %v595 = vadd.f32 0.0, %v594
    %v596 = vpop.f32.mrb[0].mxu0
    %v597 = vpop.f32.mrb[0].mxu0
    %v598 = vadd.f32 0.0, %v597
    %v599 = vpop.f32.mrb[0].mxu0
    %600 = vdwg.mxu0
    %s601 = sld [smem:[#allocation2]]
    %s602 = sadd.f32 %s601, 1.0
    %v603 = vstv %s602
    %v604 = vmul.f32 %v603, %v186
    %v605 = vmul.f32 %v603, %v191
    %v606 = vmul.f32 %v603, %v196
    %v607 = vmul.f32 %v603, %v201
    %v608 = vmul.f32 %v603, %v206
    %v609 = vmul.f32 %v603, %v211
    %v610 = vmul.f32 %v603, %v216
    %v611 = vmul.f32 %v603, %v221
    %v612 = vmul.f32 %v603, %v226
    %v613 = vmul.f32 %v603, %v231
    %v614 = vmul.f32 %v603, %v236
    %v615 = vmul.f32 %v603, %v241
    %v616 = vmul.f32 %v603, %v246
    %v617 = vmul.f32 %v603, %v251
    %v618 = vmul.f32 %v603, %v256
    %v619 = vmul.f32 %v603, %v261
    %v620 = vadd.f32 %v604, %v539
    %v621 = vadd.f32 %v605, %v542
    %v622 = vadd.f32 %v606, %v547
    %v623 = vadd.f32 %v607, %v550
    %v624 = vadd.f32 %v608, %v555
    %v625 = vadd.f32 %v609, %v558
    %v626 = vadd.f32 %v610, %v563
    %v627 = vadd.f32 %v611, %v566
    %v628 = vadd.f32 %v612, %v571
    %v629 = vadd.f32 %v613, %v574
    %v630 = vadd.f32 %v614, %v579
    %v631 = vadd.f32 %v615, %v582
    %v632 = vadd.f32 %v616, %v587
    %v633 = vadd.f32 %v617, %v590
    %v634 = vadd.f32 %v618, %v595
    %v635 = vadd.f32 %v619, %v598
    %v636 = vld [vmem:[#allocation5] sm:$0xff]
    %v637 = vld [vmem:[#allocation5 + $0x8] sm:$0xff]
    %v638 = vld [vmem:[#allocation5 + $0x10] sm:$0xff]
    %v639 = vld [vmem:[#allocation5 + $0x18] sm:$0xff]
    %v640 = vld [vmem:[#allocation5 + $0x20] sm:$0xff]
    %v641 = vld [vmem:[#allocation5 + $0x28] sm:$0xff]
    %v642 = vld [vmem:[#allocation5 + $0x30] sm:$0xff]
    %v643 = vld [vmem:[#allocation5 + $0x38] sm:$0xff]
    %v644 = vld [vmem:[#allocation5 + $0x40] sm:$0xff]
    %v645 = vld [vmem:[#allocation5 + $0x48] sm:$0xff]
    %v646 = vld [vmem:[#allocation5 + $0x50] sm:$0xff]
    %v647 = vld [vmem:[#allocation5 + $0x58] sm:$0xff]
    %v648 = vld [vmem:[#allocation5 + $0x60] sm:$0xff]
    %v649 = vld [vmem:[#allocation5 + $0x68] sm:$0xff]
    %v650 = vld [vmem:[#allocation5 + $0x70] sm:$0xff]
    %v651 = vld [vmem:[#allocation5 + $0x78] sm:$0xff]
    %v652 = vld [vmem:[%s6] sm:$0x1]
    %v654 = vlaneseq
    %v655 = vshrl.u32 %v654, 7
    %v656 = vsub.s32 0, %v655
    %v657 = vrot.slane %v652, %v656
    %659 = vmatprep.subr.mxu0 0.0
    %660 = vmatpush1.msra.mxu0 %v636
    %661 = vmatprep.subr.mxu0 0.0
    %662 = vmatpush1.msra.mxu0 %v637
    %663 = vmatprep.subr.mxu0 0.0
    %664 = vmatpush1.msra.mxu0 %v638
    %665 = vmatprep.subr.mxu0 0.0
    %666 = vmatpush1.msra.mxu0 %v639
    %667 = vmatprep.subr.mxu0 0.0
    %668 = vmatpush1.msra.mxu0 %v640
    %669 = vmatprep.subr.mxu0 0.0
    %670 = vmatpush1.msra.mxu0 %v641
    %671 = vmatprep.subr.mxu0 0.0
    %672 = vmatpush1.msra.mxu0 %v642
    %673 = vmatprep.subr.mxu0 0.0
    %674 = vmatpush1.msra.mxu0 %v643
    %675 = vmatprep.subr.mxu0 0.0
    %676 = vmatpush1.msra.mxu0 %v644
    %677 = vmatprep.subr.mxu0 0.0
    %678 = vmatpush1.msra.mxu0 %v645
    %679 = vmatprep.subr.mxu0 0.0
    %680 = vmatpush1.msra.mxu0 %v646
    %681 = vmatprep.subr.mxu0 0.0
    %682 = vmatpush1.msra.mxu0 %v647
    %683 = vmatprep.subr.mxu0 0.0
    %684 = vmatpush1.msra.mxu0 %v648
    %685 = vmatprep.subr.mxu0 0.0
    %686 = vmatpush1.msra.mxu0 %v649
    %687 = vmatprep.subr.mxu0 0.0
    %688 = vmatpush1.msra.mxu0 %v650
    %689 = vmatprep.subr.mxu0 0.0
    %690 = vmatpush1.msra.mxu0 %v651
    %691 = vmatprep.subr.mxu0 0.0
    %692 = vmatpush1.msra.mxu0 0.0
    %693 = vmatprep.subr.mxu0 0.0
    %694 = vmatpush1.msra.mxu0 0.0
    %695 = vmatprep.subr.mxu0 0.0
    %696 = vmatpush1.msra.mxu0 0.0
    %697 = vmatprep.subr.mxu0 0.0
    %698 = vmatpush1.msra.mxu0 0.0
    %699 = vmatprep.subr.mxu0 0.0
    %700 = vmatpush1.msra.mxu0 0.0
    %701 = vmatprep.subr.mxu0 0.0
    %702 = vmatpush1.msra.mxu0 0.0
    %703 = vmatprep.subr.mxu0 0.0
    %704 = vmatpush1.msra.mxu0 0.0
    %705 = vmatprep.subr.mxu0 0.0
    %706 = vmatpush1.msra.mxu0 0.0
    %707 = vmatprep.subr.mxu0 0.0
    %708 = vmatpush1.msra.mxu0 0.0
    %709 = vmatprep.subr.mxu0 0.0
    %710 = vmatpush1.msra.mxu0 0.0
    %711 = vmatprep.subr.mxu0 0.0
    %712 = vmatpush1.msra.mxu0 0.0
    %713 = vmatprep.subr.mxu0 0.0
    %714 = vmatpush1.msra.mxu0 0.0
    %715 = vmatprep.subr.mxu0 0.0
    %716 = vmatpush1.msra.mxu0 0.0
    %717 = vmatprep.subr.mxu0 0.0
    %718 = vmatpush1.msra.mxu0 0.0
    %719 = vmatprep.subr.mxu0 0.0
    %720 = vmatpush1.msra.mxu0 0.0
    %721 = vmatprep.subr.mxu0 0.0
    %722 = vmatpush1.msra.mxu0 0.0
    %723 = vmatprep.mubr.f32.mxu0 0.0
    %724 = vmatmul.mubr.f32.gmra.mrb[0].mxu0 %v620
    %v725 = vpop.f32.mrb[0].mxu0
    %v726 = vadd.f32 %v657, %v725
    %v727 = vpop.f32.mrb[0].mxu0
    %728 = vmatprep.mubr.f32.mxu0 0.0
    %729 = vmatmul.mubr.f32.gmra.mrb[0].mxu0 %v621
    %v730 = vpop.f32.mrb[0].mxu0
    %v731 = vadd.f32 %v657, %v730
    %v732 = vpop.f32.mrb[0].mxu0
    %733 = vmatprep.mubr.f32.mxu0 0.0
    %734 = vmatmul.mubr.f32.gmra.mrb[0].mxu0 %v622
    %v735 = vpop.f32.mrb[0].mxu0
    %v736 = vadd.f32 %v657, %v735
    %v737 = vpop.f32.mrb[0].mxu0
    %738 = vmatprep.mubr.f32.mxu0 0.0
    %739 = vmatmul.mubr.f32.gmra.mrb[0].mxu0 %v623
    %v740 = vpop.f32.mrb[0].mxu0
    %v741 = vadd.f32 %v657, %v740
    %v742 = vpop.f32.mrb[0].mxu0
    %743 = vmatprep.mubr.f32.mxu0 0.0
    %744 = vmatmul.mubr.f32.gmra.mrb[0].mxu0 %v624
    %v745 = vpop.f32.mrb[0].mxu0
    %v746 = vadd.f32 %v657, %v745
    %v747 = vpop.f32.mrb[0].mxu0
    %748 = vmatprep.mubr.f32.mxu0 0.0
    %749 = vmatmul.mubr.f32.gmra.mrb[0].mxu0 %v625
    %v750 = vpop.f32.mrb[0].mxu0
    %v751 = vadd.f32 %v657, %v750
    %v752 = vpop.f32.mrb[0].mxu0
    %753 = vmatprep.mubr.f32.mxu0 0.0
    %754 = vmatmul.mubr.f32.gmra.mrb[0].mxu0 %v626
    %v755 = vpop.f32.mrb[0].mxu0
    %v756 = vadd.f32 %v657, %v755
    %v757 = vpop.f32.mrb[0].mxu0
    %758 = vmatprep.mubr.f32.mxu0 0.0
    %759 = vmatmul.mubr.f32.gmra.mrb[0].mxu0 %v627
    %v760 = vpop.f32.mrb[0].mxu0
    %v761 = vadd.f32 %v657, %v760
    %v762 = vpop.f32.mrb[0].mxu0
    %763 = vmatprep.mubr.f32.mxu0 0.0
    %764 = vmatmul.mubr.f32.gmra.mrb[0].mxu0 %v628
    %v765 = vpop.f32.mrb[0].mxu0
    %v766 = vadd.f32 %v657, %v765
    %v767 = vpop.f32.mrb[0].mxu0
    %768 = vmatprep.mubr.f32.mxu0 0.0
    %769 = vmatmul.mubr.f32.gmra.mrb[0].mxu0 %v629
    %v770 = vpop.f32.mrb[0].mxu0
    %v771 = vadd.f32 %v657, %v770
    %v772 = vpop.f32.mrb[0].mxu0
    %773 = vmatprep.mubr.f32.mxu0 0.0
    %774 = vmatmul.mubr.f32.gmra.mrb[0].mxu0 %v630
    %v775 = vpop.f32.mrb[0].mxu0
    %v776 = vadd.f32 %v657, %v775
    %v777 = vpop.f32.mrb[0].mxu0
    %778 = vmatprep.mubr.f32.mxu0 0.0
    %779 = vmatmul.mubr.f32.gmra.mrb[0].mxu0 %v631
    %v780 = vpop.f32.mrb[0].mxu0
    %v781 = vadd.f32 %v657, %v780
    %v782 = vpop.f32.mrb[0].mxu0
    %783 = vmatprep.mubr.f32.mxu0 0.0
    %784 = vmatmul.mubr.f32.gmra.mrb[0].mxu0 %v632
    %v785 = vpop.f32.mrb[0].mxu0
    %v786 = vadd.f32 %v657, %v785
    %v787 = vpop.f32.mrb[0].mxu0
    %788 = vmatprep.mubr.f32.mxu0 0.0
    %789 = vmatmul.mubr.f32.gmra.mrb[0].mxu0 %v633
    %v790 = vpop.f32.mrb[0].mxu0
    %v791 = vadd.f32 %v657, %v790
    %v792 = vpop.f32.mrb[0].mxu0
    %793 = vmatprep.mubr.f32.mxu0 0.0
    %794 = vmatmul.mubr.f32.gmra.mrb[0].mxu0 %v634
    %v795 = vpop.f32.mrb[0].mxu0
    %v796 = vadd.f32 %v657, %v795
    %v797 = vpop.f32.mrb[0].mxu0
    %798 = vmatprep.mubr.f32.mxu0 0.0
    %799 = vmatmul.mubr.f32.gmra.mrb[0].mxu0 %v635
    %v800 = vpop.f32.mrb[0].mxu0
    %v801 = vadd.f32 %v657, %v800
    %v802 = vpop.f32.mrb[0].mxu0
    %803 = vdwg.mxu0
    %v804 = vmax.f32 %v726, 0.0
    %v805 = vmax.f32 %v731, 0.0
    %v806 = vmax.f32 %v736, 0.0
    %v807 = vmax.f32 %v741, 0.0
    %v808 = vmax.f32 %v746, 0.0
    %v809 = vmax.f32 %v751, 0.0
    %v810 = vmax.f32 %v756, 0.0
    %v811 = vmax.f32 %v761, 0.0
    %v812 = vmax.f32 %v766, 0.0
    %v813 = vmax.f32 %v771, 0.0
    %v814 = vmax.f32 %v776, 0.0
    %v815 = vmax.f32 %v781, 0.0
    %v816 = vmax.f32 %v786, 0.0
    %v817 = vmax.f32 %v791, 0.0
    %v818 = vmax.f32 %v796, 0.0
    %v819 = vmax.f32 %v801, 0.0
    %s820 = scalar_lea.vmem [#allocation5], 128
    %v821 = vld [vmem:[%s820] sm:$0xff]
    %v822 = vld [vmem:[%s820 + $0x8] sm:$0xff]
    %v823 = vld [vmem:[%s820 + $0x10] sm:$0xff]
    %v824 = vld [vmem:[%s820 + $0x18] sm:$0xff]
    %v825 = vld [vmem:[%s820 + $0x20] sm:$0xff]
    %v826 = vld [vmem:[%s820 + $0x28] sm:$0xff]
    %v827 = vld [vmem:[%s820 + $0x30] sm:$0xff]
    %v828 = vld [vmem:[%s820 + $0x38] sm:$0xff]
    %v829 = vld [vmem:[%s820 + $0x40] sm:$0xff]
    %v830 = vld [vmem:[%s820 + $0x48] sm:$0xff]
    %v831 = vld [vmem:[%s820 + $0x50] sm:$0xff]
    %v832 = vld [vmem:[%s820 + $0x58] sm:$0xff]
    %v833 = vld [vmem:[%s820 + $0x60] sm:$0xff]
    %v834 = vld [vmem:[%s820 + $0x68] sm:$0xff]
    %v835 = vld [vmem:[%s820 + $0x70] sm:$0xff]
    %v836 = vld [vmem:[%s820 + $0x78] sm:$0xff]
    %s837 = scalar_lea.vmem %s6, 1
    %v838 = vld [vmem:[%s837] sm:$0x1]
    %v840 = vlaneseq
    %v841 = vshrl.u32 %v840, 7
    %v842 = vsub.s32 0, %v841
    %v843 = vrot.slane %v838, %v842
    %845 = vmatprep.subr.mxu0 0.0
    %846 = vmatpush1.msra.mxu0 %v821
    %847 = vmatprep.subr.mxu0 0.0
    %848 = vmatpush1.msra.mxu0 %v822
    %849 = vmatprep.subr.mxu0 0.0
    %850 = vmatpush1.msra.mxu0 %v823
    %851 = vmatprep.subr.mxu0 0.0
    %852 = vmatpush1.msra.mxu0 %v824
    %853 = vmatprep.subr.mxu0 0.0
    %854 = vmatpush1.msra.mxu0 %v825
    %855 = vmatprep.subr.mxu0 0.0
    %856 = vmatpush1.msra.mxu0 %v826
    %857 = vmatprep.subr.mxu0 0.0
    %858 = vmatpush1.msra.mxu0 %v827
    %859 = vmatprep.subr.mxu0 0.0
    %860 = vmatpush1.msra.mxu0 %v828
    %861 = vmatprep.subr.mxu0 0.0
    %862 = vmatpush1.msra.mxu0 %v829
    %863 = vmatprep.subr.mxu0 0.0
    %864 = vmatpush1.msra.mxu0 %v830
    %865 = vmatprep.subr.mxu0 0.0
    %866 = vmatpush1.msra.mxu0 %v831
    %867 = vmatprep.subr.mxu0 0.0
    %868 = vmatpush1.msra.mxu0 %v832
    %869 = vmatprep.subr.mxu0 0.0
    %870 = vmatpush1.msra.mxu0 %v833
    %871 = vmatprep.subr.mxu0 0.0
    %872 = vmatpush1.msra.mxu0 %v834
    %873 = vmatprep.subr.mxu0 0.0
    %874 = vmatpush1.msra.mxu0 %v835
    %875 = vmatprep.subr.mxu0 0.0
    %876 = vmatpush1.msra.mxu0 %v836
    %877 = vmatprep.subr.mxu0 0.0
    %878 = vmatpush1.msra.mxu0 0.0
    %879 = vmatprep.subr.mxu0 0.0
    %880 = vmatpush1.msra.mxu0 0.0
    %881 = vmatprep.subr.mxu0 0.0
    %882 = vmatpush1.msra.mxu0 0.0
    %883 = vmatprep.subr.mxu0 0.0
    %884 = vmatpush1.msra.mxu0 0.0
    %885 = vmatprep.subr.mxu0 0.0
    %886 = vmatpush1.msra.mxu0 0.0
    %887 = vmatprep.subr.mxu0 0.0
    %888 = vmatpush1.msra.mxu0 0.0
    %889 = vmatprep.subr.mxu0 0.0
    %890 = vmatpush1.msra.mxu0 0.0
    %891 = vmatprep.subr.mxu0 0.0
    %892 = vmatpush1.msra.mxu0 0.0
    %893 = vmatprep.subr.mxu0 0.0
    %894 = vmatpush1.msra.mxu0 0.0
    %895 = vmatprep.subr.mxu0 0.0
    %896 = vmatpush1.msra.mxu0 0.0
    %897 = vmatprep.subr.mxu0 0.0
    %898 = vmatpush1.msra.mxu0 0.0
    %899 = vmatprep.subr.mxu0 0.0
    %900 = vmatpush1.msra.mxu0 0.0
    %901 = vmatprep.subr.mxu0 0.0
    %902 = vmatpush1.msra.mxu0 0.0
    %903 = vmatprep.subr.mxu0 0.0
    %904 = vmatpush1.msra.mxu0 0.0
    %905 = vmatprep.subr.mxu0 0.0
    %906 = vmatpush1.msra.mxu0 0.0
    %907 = vmatprep.subr.mxu0 0.0
    %908 = vmatpush1.msra.mxu0 0.0
    %909 = vmatprep.mubr.f32.mxu0 0.0
    %910 = vmatmul.mubr.f32.gmra.mrb[0].mxu0 %v804
    %v911 = vpop.f32.mrb[0].mxu0
    %v912 = vadd.f32 %v843, %v911
    %v913 = vpop.f32.mrb[0].mxu0
    %914 = vmatprep.mubr.f32.mxu0 0.0
    %915 = vmatmul.mubr.f32.gmra.mrb[0].mxu0 %v805
    %v916 = vpop.f32.mrb[0].mxu0
    %v917 = vadd.f32 %v843, %v916
    %v918 = vpop.f32.mrb[0].mxu0
    %919 = vmatprep.mubr.f32.mxu0 0.0
    %920 = vmatmul.mubr.f32.gmra.mrb[0].mxu0 %v806
    %v921 = vpop.f32.mrb[0].mxu0
    %v922 = vadd.f32 %v843, %v921
    %v923 = vpop.f32.mrb[0].mxu0
    %924 = vmatprep.mubr.f32.mxu0 0.0
    %925 = vmatmul.mubr.f32.gmra.mrb[0].mxu0 %v807
    %v926 = vpop.f32.mrb[0].mxu0
    %v927 = vadd.f32 %v843, %v926
    %v928 = vpop.f32.mrb[0].mxu0
    %929 = vmatprep.mubr.f32.mxu0 0.0
    %930 = vmatmul.mubr.f32.gmra.mrb[0].mxu0 %v808
    %v931 = vpop.f32.mrb[0].mxu0
    %v932 = vadd.f32 %v843, %v931
    %v933 = vpop.f32.mrb[0].mxu0
    %934 = vmatprep.mubr.f32.mxu0 0.0
    %935 = vmatmul.mubr.f32.gmra.mrb[0].mxu0 %v809
    %v936 = vpop.f32.mrb[0].mxu0
    %v937 = vadd.f32 %v843, %v936
    %v938 = vpop.f32.mrb[0].mxu0
    %939 = vmatprep.mubr.f32.mxu0 0.0
    %940 = vmatmul.mubr.f32.gmra.mrb[0].mxu0 %v810
    %v941 = vpop.f32.mrb[0].mxu0
    %v942 = vadd.f32 %v843, %v941
    %v943 = vpop.f32.mrb[0].mxu0
    %944 = vmatprep.mubr.f32.mxu0 0.0
    %945 = vmatmul.mubr.f32.gmra.mrb[0].mxu0 %v811
    %v946 = vpop.f32.mrb[0].mxu0
    %v947 = vadd.f32 %v843, %v946
    %v948 = vpop.f32.mrb[0].mxu0
    %949 = vmatprep.mubr.f32.mxu0 0.0
    %950 = vmatmul.mubr.f32.gmra.mrb[0].mxu0 %v812
    %v951 = vpop.f32.mrb[0].mxu0
    %v952 = vadd.f32 %v843, %v951
    %v953 = vpop.f32.mrb[0].mxu0
    %954 = vmatprep.mubr.f32.mxu0 0.0
    %955 = vmatmul.mubr.f32.gmra.mrb[0].mxu0 %v813
    %v956 = vpop.f32.mrb[0].mxu0
    %v957 = vadd.f32 %v843, %v956
    %v958 = vpop.f32.mrb[0].mxu0
    %959 = vmatprep.mubr.f32.mxu0 0.0
    %960 = vmatmul.mubr.f32.gmra.mrb[0].mxu0 %v814
    %v961 = vpop.f32.mrb[0].mxu0
    %v962 = vadd.f32 %v843, %v961
    %v963 = vpop.f32.mrb[0].mxu0
    %964 = vmatprep.mubr.f32.mxu0 0.0
    %965 = vmatmul.mubr.f32.gmra.mrb[0].mxu0 %v815
    %v966 = vpop.f32.mrb[0].mxu0
    %v967 = vadd.f32 %v843, %v966
    %v968 = vpop.f32.mrb[0].mxu0
    %969 = vmatprep.mubr.f32.mxu0 0.0
    %970 = vmatmul.mubr.f32.gmra.mrb[0].mxu0 %v816
    %v971 = vpop.f32.mrb[0].mxu0
    %v972 = vadd.f32 %v843, %v971
    %v973 = vpop.f32.mrb[0].mxu0
    %974 = vmatprep.mubr.f32.mxu0 0.0
    %975 = vmatmul.mubr.f32.gmra.mrb[0].mxu0 %v817
    %v976 = vpop.f32.mrb[0].mxu0
    %v977 = vadd.f32 %v843, %v976
    %v978 = vpop.f32.mrb[0].mxu0
    %979 = vmatprep.mubr.f32.mxu0 0.0
    %980 = vmatmul.mubr.f32.gmra.mrb[0].mxu0 %v818
    %v981 = vpop.f32.mrb[0].mxu0
    %v982 = vadd.f32 %v843, %v981
    %v983 = vpop.f32.mrb[0].mxu0
    %984 = vmatprep.mubr.f32.mxu0 0.0
    %985 = vmatmul.mubr.f32.gmra.mrb[0].mxu0 %v819
    %v986 = vpop.f32.mrb[0].mxu0
    %v987 = vadd.f32 %v843, %v986
    %v988 = vpop.f32.mrb[0].mxu0
    %989 = vdwg.mxu0
    %v990 = vmax.f32 %v912, 0.0
    %v991 = vmax.f32 %v917, 0.0
    %v992 = vmax.f32 %v922, 0.0
    %v993 = vmax.f32 %v927, 0.0
    %v994 = vmax.f32 %v932, 0.0
    %v995 = vmax.f32 %v937, 0.0
    %v996 = vmax.f32 %v942, 0.0
    %v997 = vmax.f32 %v947, 0.0
    %v998 = vmax.f32 %v952, 0.0
    %v999 = vmax.f32 %v957, 0.0
    %v1000 = vmax.f32 %v962, 0.0
    %v1001 = vmax.f32 %v967, 0.0
    %v1002 = vmax.f32 %v972, 0.0
    %v1003 = vmax.f32 %v977, 0.0
    %v1004 = vmax.f32 %v982, 0.0
    %v1005 = vmax.f32 %v987, 0.0
    %v1006 = vld [vmem:[%s7] sm:$0x1]
    %v1008 = vlaneseq
    %v1009 = vshrl.u32 %v1008, 7
    %v1010 = vsub.s32 0, %v1009
    %v1011 = vrot.slane %v1006, %v1010
    %v1013 = vmul.f32 %v990, %v1011
    %v1014 = vmul.f32 %v991, %v1011
    %v1015 = vmul.f32 %v992, %v1011
    %v1016 = vmul.f32 %v993, %v1011
    %v1017 = vmul.f32 %v994, %v1011
    %v1018 = vmul.f32 %v995, %v1011
    %v1019 = vmul.f32 %v996, %v1011
    %v1020 = vmul.f32 %v997, %v1011
    %v1021 = vmul.f32 %v998, %v1011
    %v1022 = vmul.f32 %v999, %v1011
    %v1023 = vmul.f32 %v1000, %v1011
    %v1024 = vmul.f32 %v1001, %v1011
    %v1025 = vmul.f32 %v1002, %v1011
    %v1026 = vmul.f32 %v1003, %v1011
    %v1027 = vmul.f32 %v1004, %v1011
    %v1028 = vmul.f32 %v1005, %v1011
    %v1029 = vld [vmem:[%s8] sm:$0x1]
    %v1031 = vlaneseq
    %v1032 = vshrl.u32 %v1031, 7
    %v1033 = vsub.s32 0, %v1032
    %v1034 = vrot.slane %v1029, %v1033
    %v1036 = vadd.f32 %v1013, %v1034
    %v1037 = vadd.f32 %v1014, %v1034
    %v1038 = vadd.f32 %v1015, %v1034
    %v1039 = vadd.f32 %v1016, %v1034
    %v1040 = vadd.f32 %v1017, %v1034
    %v1041 = vadd.f32 %v1018, %v1034
    %v1042 = vadd.f32 %v1019, %v1034
    %v1043 = vadd.f32 %v1020, %v1034
    %v1044 = vadd.f32 %v1021, %v1034
    %v1045 = vadd.f32 %v1022, %v1034
    %v1046 = vadd.f32 %v1023, %v1034
    %v1047 = vadd.f32 %v1024, %v1034
    %v1048 = vadd.f32 %v1025, %v1034
    %v1049 = vadd.f32 %v1026, %v1034
    %v1050 = vadd.f32 %v1027, %v1034
    %v1051 = vadd.f32 %v1028, %v1034
    %v1052 = vmax.f32 %v1036, 0.0
    %v1053 = vmax.f32 %v1037, 0.0
    %v1054 = vmax.f32 %v1038, 0.0
    %v1055 = vmax.f32 %v1039, 0.0
    %v1056 = vmax.f32 %v1040, 0.0
    %v1057 = vmax.f32 %v1041, 0.0
    %v1058 = vmax.f32 %v1042, 0.0
    %v1059 = vmax.f32 %v1043, 0.0
    %v1060 = vmax.f32 %v1044, 0.0
    %v1061 = vmax.f32 %v1045, 0.0
    %v1062 = vmax.f32 %v1046, 0.0
    %v1063 = vmax.f32 %v1047, 0.0
    %v1064 = vmax.f32 %v1048, 0.0
    %v1065 = vmax.f32 %v1049, 0.0
    %v1066 = vmax.f32 %v1050, 0.0
    %v1067 = vmax.f32 %v1051, 0.0
    %v1068 = vadd.f32 %v1052, %v186
    %v1069 = vadd.f32 %v1053, %v191
    %v1070 = vadd.f32 %v1054, %v196
    %v1071 = vadd.f32 %v1055, %v201
    %v1072 = vadd.f32 %v1056, %v206
    %v1073 = vadd.f32 %v1057, %v211
    %v1074 = vadd.f32 %v1058, %v216
    %v1075 = vadd.f32 %v1059, %v221
    %v1076 = vadd.f32 %v1060, %v226
    %v1077 = vadd.f32 %v1061, %v231
    %v1078 = vadd.f32 %v1062, %v236
    %v1079 = vadd.f32 %v1063, %v241
    %v1080 = vadd.f32 %v1064, %v246
    %v1081 = vadd.f32 %v1065, %v251
    %v1082 = vadd.f32 %v1066, %v256
    %v1083 = vadd.f32 %v1067, %v261
    %s1084 = scalar_lea.vmem [#allocation6], 128
    %v1085 = vld [vmem:[%s1084] sm:$0xff]
    %v1086 = vld [vmem:[%s1084 + $0x8] sm:$0xff]
    %v1087 = vld [vmem:[%s1084 + $0x10] sm:$0xff]
    %v1088 = vld [vmem:[%s1084 + $0x18] sm:$0xff]
    %v1089 = vld [vmem:[%s1084 + $0x20] sm:$0xff]
    %v1090 = vld [vmem:[%s1084 + $0x28] sm:$0xff]
    %v1091 = vld [vmem:[%s1084 + $0x30] sm:$0xff]
    %v1092 = vld [vmem:[%s1084 + $0x38] sm:$0xff]
    %v1093 = vld [vmem:[%s1084 + $0x40] sm:$0xff]
    %v1094 = vld [vmem:[%s1084 + $0x48] sm:$0xff]
    %v1095 = vld [vmem:[%s1084 + $0x50] sm:$0xff]
    %v1096 = vld [vmem:[%s1084 + $0x58] sm:$0xff]
    %v1097 = vld [vmem:[%s1084 + $0x60] sm:$0xff]
    %v1098 = vld [vmem:[%s1084 + $0x68] sm:$0xff]
    %v1099 = vld [vmem:[%s1084 + $0x70] sm:$0xff]
    %v1100 = vld [vmem:[%s1084 + $0x78] sm:$0xff]
    %1101 = vmatprep.subr.mxu0 0.0
    %1102 = vmatpush1.msra.mxu0 %v1085
    %1103 = vmatprep.subr.mxu0 0.0
    %1104 = vmatpush1.msra.mxu0 %v1086
    %1105 = vmatprep.subr.mxu0 0.0
    %1106 = vmatpush1.msra.mxu0 %v1087
    %1107 = vmatprep.subr.mxu0 0.0
    %1108 = vmatpush1.msra.mxu0 %v1088
    %1109 = vmatprep.subr.mxu0 0.0
    %1110 = vmatpush1.msra.mxu0 %v1089
    %1111 = vmatprep.subr.mxu0 0.0
    %1112 = vmatpush1.msra.mxu0 %v1090
    %1113 = vmatprep.subr.mxu0 0.0
    %1114 = vmatpush1.msra.mxu0 %v1091
    %1115 = vmatprep.subr.mxu0 0.0
    %1116 = vmatpush1.msra.mxu0 %v1092
    %1117 = vmatprep.subr.mxu0 0.0
    %1118 = vmatpush1.msra.mxu0 %v1093
    %1119 = vmatprep.subr.mxu0 0.0
    %1120 = vmatpush1.msra.mxu0 %v1094
    %1121 = vmatprep.subr.mxu0 0.0
    %1122 = vmatpush1.msra.mxu0 %v1095
    %1123 = vmatprep.subr.mxu0 0.0
    %1124 = vmatpush1.msra.mxu0 %v1096
    %1125 = vmatprep.subr.mxu0 0.0
    %1126 = vmatpush1.msra.mxu0 %v1097
    %1127 = vmatprep.subr.mxu0 0.0
    %1128 = vmatpush1.msra.mxu0 %v1098
    %1129 = vmatprep.subr.mxu0 0.0
    %1130 = vmatpush1.msra.mxu0 %v1099
    %1131 = vmatprep.subr.mxu0 0.0
    %1132 = vmatpush1.msra.mxu0 %v1100
    %1133 = vmatprep.subr.mxu0 0.0
    %1134 = vmatpush1.msra.mxu0 0.0
    %1135 = vmatprep.subr.mxu0 0.0
    %1136 = vmatpush1.msra.mxu0 0.0
    %1137 = vmatprep.subr.mxu0 0.0
    %1138 = vmatpush1.msra.mxu0 0.0
    %1139 = vmatprep.subr.mxu0 0.0
    %1140 = vmatpush1.msra.mxu0 0.0
    %1141 = vmatprep.subr.mxu0 0.0
    %1142 = vmatpush1.msra.mxu0 0.0
    %1143 = vmatprep.subr.mxu0 0.0
    %1144 = vmatpush1.msra.mxu0 0.0
    %1145 = vmatprep.subr.mxu0 0.0
    %1146 = vmatpush1.msra.mxu0 0.0
    %1147 = vmatprep.subr.mxu0 0.0
    %1148 = vmatpush1.msra.mxu0 0.0
    %1149 = vmatprep.subr.mxu0 0.0
    %1150 = vmatpush1.msra.mxu0 0.0
    %1151 = vmatprep.subr.mxu0 0.0
    %1152 = vmatpush1.msra.mxu0 0.0
    %1153 = vmatprep.subr.mxu0 0.0
    %1154 = vmatpush1.msra.mxu0 0.0
    %1155 = vmatprep.subr.mxu0 0.0
    %1156 = vmatpush1.msra.mxu0 0.0
    %1157 = vmatprep.subr.mxu0 0.0
    %1158 = vmatpush1.msra.mxu0 0.0
    %1159 = vmatprep.subr.mxu0 0.0
    %1160 = vmatpush1.msra.mxu0 0.0
    %1161 = vmatprep.subr.mxu0 0.0
    %1162 = vmatpush1.msra.mxu0 0.0
    %1163 = vmatprep.subr.mxu0 0.0
    %1164 = vmatpush1.msra.mxu0 0.0
    %1165 = vmatprep.mubr.f32.mxu0 0.0
    %1166 = vmatmul.mubr.f32.gmra.mrb[0].mxu0 %v1068
    %v1167 = vpop.f32.mrb[0].mxu0
    %v1168 = vadd.f32 0.0, %v1167
    %v1169 = vpop.f32.mrb[0].mxu0
    %1170 = vmatprep.mubr.f32.mxu0 0.0
    %1171 = vmatmul.mubr.f32.gmra.mrb[0].mxu0 %v1069
    %v1172 = vpop.f32.mrb[0].mxu0
    %v1173 = vadd.f32 0.0, %v1172
    %v1174 = vpop.f32.mrb[0].mxu0
    %1175 = vmatprep.mubr.f32.mxu0 0.0
    %1176 = vmatmul.mubr.f32.gmra.mrb[0].mxu0 %v1070
    %v1177 = vpop.f32.mrb[0].mxu0
    %v1178 = vadd.f32 0.0, %v1177
    %v1179 = vpop.f32.mrb[0].mxu0
    %1180 = vmatprep.mubr.f32.mxu0 0.0
    %1181 = vmatmul.mubr.f32.gmra.mrb[0].mxu0 %v1071
    %v1182 = vpop.f32.mrb[0].mxu0
    %v1183 = vadd.f32 0.0, %v1182
    %v1184 = vpop.f32.mrb[0].mxu0
    %1185 = vmatprep.mubr.f32.mxu0 0.0
    %1186 = vmatmul.mubr.f32.gmra.mrb[0].mxu0 %v1072
    %v1187 = vpop.f32.mrb[0].mxu0
    %v1188 = vadd.f32 0.0, %v1187
    %v1189 = vpop.f32.mrb[0].mxu0
    %1190 = vmatprep.mubr.f32.mxu0 0.0
    %1191 = vmatmul.mubr.f32.gmra.mrb[0].mxu0 %v1073
    %v1192 = vpop.f32.mrb[0].mxu0
    %v1193 = vadd.f32 0.0, %v1192
    %v1194 = vpop.f32.mrb[0].mxu0
    %1195 = vmatprep.mubr.f32.mxu0 0.0
    %1196 = vmatmul.mubr.f32.gmra.mrb[0].mxu0 %v1074
    %v1197 = vpop.f32.mrb[0].mxu0
    %v1198 = vadd.f32 0.0, %v1197
    %v1199 = vpop.f32.mrb[0].mxu0
    %1200 = vmatprep.mubr.f32.mxu0 0.0
    %1201 = vmatmul.mubr.f32.gmra.mrb[0].mxu0 %v1075
    %v1202 = vpop.f32.mrb[0].mxu0
    %v1203 = vadd.f32 0.0, %v1202
    %v1204 = vpop.f32.mrb[0].mxu0
    %1205 = vmatprep.mubr.f32.mxu0 0.0
    %1206 = vmatmul.mubr.f32.gmra.mrb[0].mxu0 %v1076
    %v1207 = vpop.f32.mrb[0].mxu0
    %v1208 = vadd.f32 0.0, %v1207
    %v1209 = vpop.f32.mrb[0].mxu0
    %1210 = vmatprep.mubr.f32.mxu0 0.0
    %1211 = vmatmul.mubr.f32.gmra.mrb[0].mxu0 %v1077
    %v1212 = vpop.f32.mrb[0].mxu0
    %v1213 = vadd.f32 0.0, %v1212
    %v1214 = vpop.f32.mrb[0].mxu0
    %1215 = vmatprep.mubr.f32.mxu0 0.0
    %1216 = vmatmul.mubr.f32.gmra.mrb[0].mxu0 %v1078
    %v1217 = vpop.f32.mrb[0].mxu0
    %v1218 = vadd.f32 0.0, %v1217
    %v1219 = vpop.f32.mrb[0].mxu0
    %1220 = vmatprep.mubr.f32.mxu0 0.0
    %1221 = vmatmul.mubr.f32.gmra.mrb[0].mxu0 %v1079
    %v1222 = vpop.f32.mrb[0].mxu0
    %v1223 = vadd.f32 0.0, %v1222
    %v1224 = vpop.f32.mrb[0].mxu0
    %1225 = vmatprep.mubr.f32.mxu0 0.0
    %1226 = vmatmul.mubr.f32.gmra.mrb[0].mxu0 %v1080
    %v1227 = vpop.f32.mrb[0].mxu0
    %v1228 = vadd.f32 0.0, %v1227
    %v1229 = vpop.f32.mrb[0].mxu0
    %1230 = vmatprep.mubr.f32.mxu0 0.0
    %1231 = vmatmul.mubr.f32.gmra.mrb[0].mxu0 %v1081
    %v1232 = vpop.f32.mrb[0].mxu0
    %v1233 = vadd.f32 0.0, %v1232
    %v1234 = vpop.f32.mrb[0].mxu0
    %1235 = vmatprep.mubr.f32.mxu0 0.0
    %1236 = vmatmul.mubr.f32.gmra.mrb[0].mxu0 %v1082
    %v1237 = vpop.f32.mrb[0].mxu0
    %v1238 = vadd.f32 0.0, %v1237
    %v1239 = vpop.f32.mrb[0].mxu0
    %1240 = vmatprep.mubr.f32.mxu0 0.0
    %1241 = vmatmul.mubr.f32.gmra.mrb[0].mxu0 %v1083
    %v1242 = vpop.f32.mrb[0].mxu0
    %v1243 = vadd.f32 0.0, %v1242
    %v1244 = vpop.f32.mrb[0].mxu0
    %1245 = vdwg.mxu0
    %v1246 = vadd.f32 %v354, %v1168
    %v1247 = vadd.f32 %v359, %v1173
    %v1248 = vadd.f32 %v364, %v1178
    %v1249 = vadd.f32 %v369, %v1183
    %v1250 = vadd.f32 %v374, %v1188
    %v1251 = vadd.f32 %v379, %v1193
    %v1252 = vadd.f32 %v384, %v1198
    %v1253 = vadd.f32 %v389, %v1203
    %v1254 = vadd.f32 %v394, %v1208
    %v1255 = vadd.f32 %v399, %v1213
    %v1256 = vadd.f32 %v404, %v1218
    %v1257 = vadd.f32 %v409, %v1223
    %v1258 = vadd.f32 %v414, %v1228
    %v1259 = vadd.f32 %v419, %v1233
    %v1260 = vadd.f32 %v424, %v1238
    %v1261 = vadd.f32 %v429, %v1243
    %s1262 = scalar_lea.vmem %s10, 1
    %v1263 = vld [vmem:[%s1262] sm:$0x1]
    %v1265 = vlaneseq
    %v1266 = vshrl.u32 %v1265, 7
    %v1267 = vsub.s32 0, %v1266
    %v1268 = vrot.slane %v1263, %v1267
    %v1270 = vadd.f32 %v1246, %v1268
    %v1271 = vadd.f32 %v1247, %v1268
    %v1272 = vadd.f32 %v1248, %v1268
    %v1273 = vadd.f32 %v1249, %v1268
    %v1274 = vadd.f32 %v1250, %v1268
    %v1275 = vadd.f32 %v1251, %v1268
    %v1276 = vadd.f32 %v1252, %v1268
    %v1277 = vadd.f32 %v1253, %v1268
    %v1278 = vadd.f32 %v1254, %v1268
    %v1279 = vadd.f32 %v1255, %v1268
    %v1280 = vadd.f32 %v1256, %v1268
    %v1281 = vadd.f32 %v1257, %v1268
    %v1282 = vadd.f32 %v1258, %v1268
    %v1283 = vadd.f32 %v1259, %v1268
    %v1284 = vadd.f32 %v1260, %v1268
    %v1285 = vadd.f32 %v1261, %v1268
    %v1286 = vpack.c.bf16 %v1069, %v1068
    %v1287 = vpack.c.bf16 %v1071, %v1070
    %v1288 = vpack.c.bf16 %v1073, %v1072
    %v1289 = vpack.c.bf16 %v1075, %v1074
    %v1290 = vpack.c.bf16 %v1077, %v1076
    %v1291 = vpack.c.bf16 %v1079, %v1078
    %v1292 = vpack.c.bf16 %v1081, %v1080
    %v1293 = vpack.c.bf16 %v1083, %v1082
    %1294 = vmatprep.subr.bf16.mxu0 0
    %1295 = vmatpush1.bf16.msra.mxu0 %v1286
    %1296 = vmatprep.subr.bf16.mxu0 0
    %1297 = vmatpush1.bf16.msra.mxu0 %v1287
    %1298 = vmatprep.subr.bf16.mxu0 0
    %1299 = vmatpush1.bf16.msra.mxu0 %v1288
    %1300 = vmatprep.subr.bf16.mxu0 0
    %1301 = vmatpush1.bf16.msra.mxu0 %v1289
    %1302 = vmatprep.subr.bf16.mxu0 0
    %1303 = vmatpush1.bf16.msra.mxu0 %v1290
    %1304 = vmatprep.subr.bf16.mxu0 0
    %1305 = vmatpush1.bf16.msra.mxu0 %v1291
    %1306 = vmatprep.subr.bf16.mxu0 0
    %1307 = vmatpush1.bf16.msra.mxu0 %v1292
    %1308 = vmatprep.subr.bf16.mxu0 0
    %1309 = vmatpush1.bf16.msra.mxu0 %v1293
    %1310 = vmatprep.subr.bf16.mxu0 0
    %1311 = vmatpush1.bf16.msra.mxu0 0
    %1312 = vmatprep.subr.bf16.mxu0 0
    %1313 = vmatpush1.bf16.msra.mxu0 0
    %1314 = vmatprep.subr.bf16.mxu0 0
    %1315 = vmatpush1.bf16.msra.mxu0 0
    %1316 = vmatprep.subr.bf16.mxu0 0
    %1317 = vmatpush1.bf16.msra.mxu0 0
    %1318 = vmatprep.subr.bf16.mxu0 0
    %1319 = vmatpush1.bf16.msra.mxu0 0
    %1320 = vmatprep.subr.bf16.mxu0 0
    %1321 = vmatpush1.bf16.msra.mxu0 0
    %1322 = vmatprep.subr.bf16.mxu0 0
    %1323 = vmatpush1.bf16.msra.mxu0 0
    %1324 = vmatprep.subr.bf16.mxu0 0
    %1325 = vmatpush1.bf16.msra.mxu0 0
    %1326 = vmatprep.mubr.bf16.mxu0 0
    %1327 = vmatmul.mubr.bf16.gmra.mrb[0].mxu0 %v488
    %v1328 = vpop.f32.mrb[0].mxu0
    %v1329 = vadd.f32 0.0, %v1328
    %v1330 = vpop.f32.mrb[0].mxu0
    %v1331 = vpop.f32.mrb[0].mxu0
    %v1332 = vadd.f32 0.0, %v1331
    %v1333 = vpop.f32.mrb[0].mxu0
    %1334 = vmatprep.mubr.bf16.mxu0 0
    %1335 = vmatmul.mubr.bf16.gmra.mrb[0].mxu0 %v489
    %v1336 = vpop.f32.mrb[0].mxu0
    %v1337 = vadd.f32 0.0, %v1336
    %v1338 = vpop.f32.mrb[0].mxu0
    %v1339 = vpop.f32.mrb[0].mxu0
    %v1340 = vadd.f32 0.0, %v1339
    %v1341 = vpop.f32.mrb[0].mxu0
    %1342 = vmatprep.mubr.bf16.mxu0 0
    %1343 = vmatmul.mubr.bf16.gmra.mrb[0].mxu0 %v490
    %v1344 = vpop.f32.mrb[0].mxu0
    %v1345 = vadd.f32 0.0, %v1344
    %v1346 = vpop.f32.mrb[0].mxu0
    %v1347 = vpop.f32.mrb[0].mxu0
    %v1348 = vadd.f32 0.0, %v1347
    %v1349 = vpop.f32.mrb[0].mxu0
    %1350 = vmatprep.mubr.bf16.mxu0 0
    %1351 = vmatmul.mubr.bf16.gmra.mrb[0].mxu0 %v491
    %v1352 = vpop.f32.mrb[0].mxu0
    %v1353 = vadd.f32 0.0, %v1352
    %v1354 = vpop.f32.mrb[0].mxu0
    %v1355 = vpop.f32.mrb[0].mxu0
    %v1356 = vadd.f32 0.0, %v1355
    %v1357 = vpop.f32.mrb[0].mxu0
    %1358 = vmatprep.mubr.bf16.mxu0 0
    %1359 = vmatmul.mubr.bf16.gmra.mrb[0].mxu0 %v492
    %v1360 = vpop.f32.mrb[0].mxu0
    %v1361 = vadd.f32 0.0, %v1360
    %v1362 = vpop.f32.mrb[0].mxu0
    %v1363 = vpop.f32.mrb[0].mxu0
    %v1364 = vadd.f32 0.0, %v1363
    %v1365 = vpop.f32.mrb[0].mxu0
    %1366 = vmatprep.mubr.bf16.mxu0 0
    %1367 = vmatmul.mubr.bf16.gmra.mrb[0].mxu0 %v493
    %v1368 = vpop.f32.mrb[0].mxu0
    %v1369 = vadd.f32 0.0, %v1368
    %v1370 = vpop.f32.mrb[0].mxu0
    %v1371 = vpop.f32.mrb[0].mxu0
    %v1372 = vadd.f32 0.0, %v1371
    %v1373 = vpop.f32.mrb[0].mxu0
    %1374 = vmatprep.mubr.bf16.mxu0 0
    %1375 = vmatmul.mubr.bf16.gmra.mrb[0].mxu0 %v494
    %v1376 = vpop.f32.mrb[0].mxu0
    %v1377 = vadd.f32 0.0, %v1376
    %v1378 = vpop.f32.mrb[0].mxu0
    %v1379 = vpop.f32.mrb[0].mxu0
    %v1380 = vadd.f32 0.0, %v1379
    %v1381 = vpop.f32.mrb[0].mxu0
    %1382 = vmatprep.mubr.bf16.mxu0 0
    %1383 = vmatmul.mubr.bf16.gmra.mrb[0].mxu0 %v495
    %v1384 = vpop.f32.mrb[0].mxu0
    %v1385 = vadd.f32 0.0, %v1384
    %v1386 = vpop.f32.mrb[0].mxu0
    %v1387 = vpop.f32.mrb[0].mxu0
    %v1388 = vadd.f32 0.0, %v1387
    %v1389 = vpop.f32.mrb[0].mxu0
    %1390 = vdwg.mxu0
    %s1391 = sld [smem:[#allocation2 + $0x1]]
    %s1392 = sadd.f32 %s1391, 1.0
    %v1393 = vstv %s1392
    %v1394 = vmul.f32 %v1393, %v1068
    %v1395 = vmul.f32 %v1393, %v1069
    %v1396 = vmul.f32 %v1393, %v1070
    %v1397 = vmul.f32 %v1393, %v1071
    %v1398 = vmul.f32 %v1393, %v1072
    %v1399 = vmul.f32 %v1393, %v1073
    %v1400 = vmul.f32 %v1393, %v1074
    %v1401 = vmul.f32 %v1393, %v1075
    %v1402 = vmul.f32 %v1393, %v1076
    %v1403 = vmul.f32 %v1393, %v1077
    %v1404 = vmul.f32 %v1393, %v1078
    %v1405 = vmul.f32 %v1393, %v1079
    %v1406 = vmul.f32 %v1393, %v1080
    %v1407 = vmul.f32 %v1393, %v1081
    %v1408 = vmul.f32 %v1393, %v1082
    %v1409 = vmul.f32 %v1393, %v1083
    %v1410 = vadd.f32 %v1394, %v1329
    %v1411 = vadd.f32 %v1395, %v1332
    %v1412 = vadd.f32 %v1396, %v1337
    %v1413 = vadd.f32 %v1397, %v1340
    %v1414 = vadd.f32 %v1398, %v1345
    %v1415 = vadd.f32 %v1399, %v1348
    %v1416 = vadd.f32 %v1400, %v1353
    %v1417 = vadd.f32 %v1401, %v1356
    %v1418 = vadd.f32 %v1402, %v1361
    %v1419 = vadd.f32 %v1403, %v1364
    %v1420 = vadd.f32 %v1404, %v1369
    %v1421 = vadd.f32 %v1405, %v1372
    %v1422 = vadd.f32 %v1406, %v1377
    %v1423 = vadd.f32 %v1407, %v1380
    %v1424 = vadd.f32 %v1408, %v1385
    %v1425 = vadd.f32 %v1409, %v1388
    %s1426 = scalar_lea.vmem [#allocation5], 256
    %v1427 = vld [vmem:[%s1426] sm:$0xff]
    %v1428 = vld [vmem:[%s1426 + $0x8] sm:$0xff]
    %v1429 = vld [vmem:[%s1426 + $0x10] sm:$0xff]
    %v1430 = vld [vmem:[%s1426 + $0x18] sm:$0xff]
    %v1431 = vld [vmem:[%s1426 + $0x20] sm:$0xff]
    %v1432 = vld [vmem:[%s1426 + $0x28] sm:$0xff]
    %v1433 = vld [vmem:[%s1426 + $0x30] sm:$0xff]
    %v1434 = vld [vmem:[%s1426 + $0x38] sm:$0xff]
    %v1435 = vld [vmem:[%s1426 + $0x40] sm:$0xff]
    %v1436 = vld [vmem:[%s1426 + $0x48] sm:$0xff]
    %v1437 = vld [vmem:[%s1426 + $0x50] sm:$0xff]
    %v1438 = vld [vmem:[%s1426 + $0x58] sm:$0xff]
    %v1439 = vld [vmem:[%s1426 + $0x60] sm:$0xff]
    %v1440 = vld [vmem:[%s1426 + $0x68] sm:$0xff]
    %v1441 = vld [vmem:[%s1426 + $0x70] sm:$0xff]
    %v1442 = vld [vmem:[%s1426 + $0x78] sm:$0xff]
    %s1443 = scalar_lea.vmem %s6, 2
    %v1444 = vld [vmem:[%s1443] sm:$0x1]
    %v1446 = vlaneseq
    %v1447 = vshrl.u32 %v1446, 7
    %v1448 = vsub.s32 0, %v1447
    %v1449 = vrot.slane %v1444, %v1448
    %1451 = vmatprep.subr.mxu0 0.0
    %1452 = vmatpush1.msra.mxu0 %v1427
    %1453 = vmatprep.subr.mxu0 0.0
    %1454 = vmatpush1.msra.mxu0 %v1428
    %1455 = vmatprep.subr.mxu0 0.0
    %1456 = vmatpush1.msra.mxu0 %v1429
    %1457 = vmatprep.subr.mxu0 0.0
    %1458 = vmatpush1.msra.mxu0 %v1430
    %1459 = vmatprep.subr.mxu0 0.0
    %1460 = vmatpush1.msra.mxu0 %v1431
    %1461 = vmatprep.subr.mxu0 0.0
    %1462 = vmatpush1.msra.mxu0 %v1432
    %1463 = vmatprep.subr.mxu0 0.0
    %1464 = vmatpush1.msra.mxu0 %v1433
    %1465 = vmatprep.subr.mxu0 0.0
    %1466 = vmatpush1.msra.mxu0 %v1434
    %1467 = vmatprep.subr.mxu0 0.0
    %1468 = vmatpush1.msra.mxu0 %v1435
    %1469 = vmatprep.subr.mxu0 0.0
    %1470 = vmatpush1.msra.mxu0 %v1436
    %1471 = vmatprep.subr.mxu0 0.0
    %1472 = vmatpush1.msra.mxu0 %v1437
    %1473 = vmatprep.subr.mxu0 0.0
    %1474 = vmatpush1.msra.mxu0 %v1438
    %1475 = vmatprep.subr.mxu0 0.0
    %1476 = vmatpush1.msra.mxu0 %v1439
    %1477 = vmatprep.subr.mxu0 0.0
    %1478 = vmatpush1.msra.mxu0 %v1440
    %1479 = vmatprep.subr.mxu0 0.0
    %1480 = vmatpush1.msra.mxu0 %v1441
    %1481 = vmatprep.subr.mxu0 0.0
    %1482 = vmatpush1.msra.mxu0 %v1442
    %1483 = vmatprep.subr.mxu0 0.0
    %1484 = vmatpush1.msra.mxu0 0.0
    %1485 = vmatprep.subr.mxu0 0.0
    %1486 = vmatpush1.msra.mxu0 0.0
    %1487 = vmatprep.subr.mxu0 0.0
    %1488 = vmatpush1.msra.mxu0 0.0
    %1489 = vmatprep.subr.mxu0 0.0
    %1490 = vmatpush1.msra.mxu0 0.0
    %1491 = vmatprep.subr.mxu0 0.0
    %1492 = vmatpush1.msra.mxu0 0.0
    %1493 = vmatprep.subr.mxu0 0.0
    %1494 = vmatpush1.msra.mxu0 0.0
    %1495 = vmatprep.subr.mxu0 0.0
    %1496 = vmatpush1.msra.mxu0 0.0
    %1497 = vmatprep.subr.mxu0 0.0
    %1498 = vmatpush1.msra.mxu0 0.0
    %1499 = vmatprep.subr.mxu0 0.0
    %1500 = vmatpush1.msra.mxu0 0.0
    %1501 = vmatprep.subr.mxu0 0.0
    %1502 = vmatpush1.msra.mxu0 0.0
    %1503 = vmatprep.subr.mxu0 0.0
    %1504 = vmatpush1.msra.mxu0 0.0
    %1505 = vmatprep.subr.mxu0 0.0
    %1506 = vmatpush1.msra.mxu0 0.0
    %1507 = vmatprep.subr.mxu0 0.0
    %1508 = vmatpush1.msra.mxu0 0.0
    %1509 = vmatprep.subr.mxu0 0.0
    %1510 = vmatpush1.msra.mxu0 0.0
    %1511 = vmatprep.subr.mxu0 0.0
    %1512 = vmatpush1.msra.mxu0 0.0
    %1513 = vmatprep.subr.mxu0 0.0
    %1514 = vmatpush1.msra.mxu0 0.0
    %1515 = vmatprep.mubr.f32.mxu0 0.0
    %1516 = vmatmul.mubr.f32.gmra.mrb[0].mxu0 %v1410
    %v1517 = vpop.f32.mrb[0].mxu0
    %v1518 = vadd.f32 %v1449, %v1517
    %v1519 = vpop.f32.mrb[0].mxu0
    %1520 = vmatprep.mubr.f32.mxu0 0.0
    %1521 = vmatmul.mubr.f32.gmra.mrb[0].mxu0 %v1411
    %v1522 = vpop.f32.mrb[0].mxu0
    %v1523 = vadd.f32 %v1449, %v1522
    %v1524 = vpop.f32.mrb[0].mxu0
    %1525 = vmatprep.mubr.f32.mxu0 0.0
    %1526 = vmatmul.mubr.f32.gmra.mrb[0].mxu0 %v1412
    %v1527 = vpop.f32.mrb[0].mxu0
    %v1528 = vadd.f32 %v1449, %v1527
    %v1529 = vpop.f32.mrb[0].mxu0
    %1530 = vmatprep.mubr.f32.mxu0 0.0
    %1531 = vmatmul.mubr.f32.gmra.mrb[0].mxu0 %v1413
    %v1532 = vpop.f32.mrb[0].mxu0
    %v1533 = vadd.f32 %v1449, %v1532
    %v1534 = vpop.f32.mrb[0].mxu0
    %1535 = vmatprep.mubr.f32.mxu0 0.0
    %1536 = vmatmul.mubr.f32.gmra.mrb[0].mxu0 %v1414
    %v1537 = vpop.f32.mrb[0].mxu0
    %v1538 = vadd.f32 %v1449, %v1537
    %v1539 = vpop.f32.mrb[0].mxu0
    %1540 = vmatprep.mubr.f32.mxu0 0.0
    %1541 = vmatmul.mubr.f32.gmra.mrb[0].mxu0 %v1415
    %v1542 = vpop.f32.mrb[0].mxu0
    %v1543 = vadd.f32 %v1449, %v1542
    %v1544 = vpop.f32.mrb[0].mxu0
    %1545 = vmatprep.mubr.f32.mxu0 0.0
    %1546 = vmatmul.mubr.f32.gmra.mrb[0].mxu0 %v1416
    %v1547 = vpop.f32.mrb[0].mxu0
    %v1548 = vadd.f32 %v1449, %v1547
    %v1549 = vpop.f32.mrb[0].mxu0
    %1550 = vmatprep.mubr.f32.mxu0 0.0
    %1551 = vmatmul.mubr.f32.gmra.mrb[0].mxu0 %v1417
    %v1552 = vpop.f32.mrb[0].mxu0
    %v1553 = vadd.f32 %v1449, %v1552
    %v1554 = vpop.f32.mrb[0].mxu0
    %1555 = vmatprep.mubr.f32.mxu0 0.0
    %1556 = vmatmul.mubr.f32.gmra.mrb[0].mxu0 %v1418
    %v1557 = vpop.f32.mrb[0].mxu0
    %v1558 = vadd.f32 %v1449, %v1557
    %v1559 = vpop.f32.mrb[0].mxu0
    %1560 = vmatprep.mubr.f32.mxu0 0.0
    %1561 = vmatmul.mubr.f32.gmra.mrb[0].mxu0 %v1419
    %v1562 = vpop.f32.mrb[0].mxu0
    %v1563 = vadd.f32 %v1449, %v1562
    %v1564 = vpop.f32.mrb[0].mxu0
    %1565 = vmatprep.mubr.f32.mxu0 0.0
    %1566 = vmatmul.mubr.f32.gmra.mrb[0].mxu0 %v1420
    %v1567 = vpop.f32.mrb[0].mxu0
    %v1568 = vadd.f32 %v1449, %v1567
    %v1569 = vpop.f32.mrb[0].mxu0
    %1570 = vmatprep.mubr.f32.mxu0 0.0
    %1571 = vmatmul.mubr.f32.gmra.mrb[0].mxu0 %v1421
    %v1572 = vpop.f32.mrb[0].mxu0
    %v1573 = vadd.f32 %v1449, %v1572
    %v1574 = vpop.f32.mrb[0].mxu0
    %1575 = vmatprep.mubr.f32.mxu0 0.0
    %1576 = vmatmul.mubr.f32.gmra.mrb[0].mxu0 %v1422
    %v1577 = vpop.f32.mrb[0].mxu0
    %v1578 = vadd.f32 %v1449, %v1577
    %v1579 = vpop.f32.mrb[0].mxu0
    %1580 = vmatprep.mubr.f32.mxu0 0.0
    %1581 = vmatmul.mubr.f32.gmra.mrb[0].mxu0 %v1423
    %v1582 = vpop.f32.mrb[0].mxu0
    %v1583 = vadd.f32 %v1449, %v1582
    %v1584 = vpop.f32.mrb[0].mxu0
    %1585 = vmatprep.mubr.f32.mxu0 0.0
    %1586 = vmatmul.mubr.f32.gmra.mrb[0].mxu0 %v1424
    %v1587 = vpop.f32.mrb[0].mxu0
    %v1588 = vadd.f32 %v1449, %v1587
    %v1589 = vpop.f32.mrb[0].mxu0
    %1590 = vmatprep.mubr.f32.mxu0 0.0
    %1591 = vmatmul.mubr.f32.gmra.mrb[0].mxu0 %v1425
    %v1592 = vpop.f32.mrb[0].mxu0
    %v1593 = vadd.f32 %v1449, %v1592
    %v1594 = vpop.f32.mrb[0].mxu0
    %1595 = vdwg.mxu0
    %v1596 = vmax.f32 %v1518, 0.0
    %v1597 = vmax.f32 %v1523, 0.0
    %v1598 = vmax.f32 %v1528, 0.0
    %v1599 = vmax.f32 %v1533, 0.0
    %v1600 = vmax.f32 %v1538, 0.0
    %v1601 = vmax.f32 %v1543, 0.0
    %v1602 = vmax.f32 %v1548, 0.0
    %v1603 = vmax.f32 %v1553, 0.0
    %v1604 = vmax.f32 %v1558, 0.0
    %v1605 = vmax.f32 %v1563, 0.0
    %v1606 = vmax.f32 %v1568, 0.0
    %v1607 = vmax.f32 %v1573, 0.0
    %v1608 = vmax.f32 %v1578, 0.0
    %v1609 = vmax.f32 %v1583, 0.0
    %v1610 = vmax.f32 %v1588, 0.0
    %v1611 = vmax.f32 %v1593, 0.0
    %s1612 = scalar_lea.vmem [#allocation5], 384
    %v1613 = vld [vmem:[%s1612] sm:$0xff]
    %v1614 = vld [vmem:[%s1612 + $0x8] sm:$0xff]
    %v1615 = vld [vmem:[%s1612 + $0x10] sm:$0xff]
    %v1616 = vld [vmem:[%s1612 + $0x18] sm:$0xff]
    %v1617 = vld [vmem:[%s1612 + $0x20] sm:$0xff]
    %v1618 = vld [vmem:[%s1612 + $0x28] sm:$0xff]
    %v1619 = vld [vmem:[%s1612 + $0x30] sm:$0xff]
    %v1620 = vld [vmem:[%s1612 + $0x38] sm:$0xff]
    %v1621 = vld [vmem:[%s1612 + $0x40] sm:$0xff]
    %v1622 = vld [vmem:[%s1612 + $0x48] sm:$0xff]
    %v1623 = vld [vmem:[%s1612 + $0x50] sm:$0xff]
    %v1624 = vld [vmem:[%s1612 + $0x58] sm:$0xff]
    %v1625 = vld [vmem:[%s1612 + $0x60] sm:$0xff]
    %v1626 = vld [vmem:[%s1612 + $0x68] sm:$0xff]
    %v1627 = vld [vmem:[%s1612 + $0x70] sm:$0xff]
    %v1628 = vld [vmem:[%s1612 + $0x78] sm:$0xff]
    %s1629 = scalar_lea.vmem %s6, 3
    %v1630 = vld [vmem:[%s1629] sm:$0x1]
    %v1632 = vlaneseq
    %v1633 = vshrl.u32 %v1632, 7
    %v1634 = vsub.s32 0, %v1633
    %v1635 = vrot.slane %v1630, %v1634
    %1637 = vmatprep.subr.mxu0 0.0
    %1638 = vmatpush1.msra.mxu0 %v1613
    %1639 = vmatprep.subr.mxu0 0.0
    %1640 = vmatpush1.msra.mxu0 %v1614
    %1641 = vmatprep.subr.mxu0 0.0
    %1642 = vmatpush1.msra.mxu0 %v1615
    %1643 = vmatprep.subr.mxu0 0.0
    %1644 = vmatpush1.msra.mxu0 %v1616
    %1645 = vmatprep.subr.mxu0 0.0
    %1646 = vmatpush1.msra.mxu0 %v1617
    %1647 = vmatprep.subr.mxu0 0.0
    %1648 = vmatpush1.msra.mxu0 %v1618
    %1649 = vmatprep.subr.mxu0 0.0
    %1650 = vmatpush1.msra.mxu0 %v1619
    %1651 = vmatprep.subr.mxu0 0.0
    %1652 = vmatpush1.msra.mxu0 %v1620
    %1653 = vmatprep.subr.mxu0 0.0
    %1654 = vmatpush1.msra.mxu0 %v1621
    %1655 = vmatprep.subr.mxu0 0.0
    %1656 = vmatpush1.msra.mxu0 %v1622
    %1657 = vmatprep.subr.mxu0 0.0
    %1658 = vmatpush1.msra.mxu0 %v1623
    %1659 = vmatprep.subr.mxu0 0.0
    %1660 = vmatpush1.msra.mxu0 %v1624
    %1661 = vmatprep.subr.mxu0 0.0
    %1662 = vmatpush1.msra.mxu0 %v1625
    %1663 = vmatprep.subr.mxu0 0.0
    %1664 = vmatpush1.msra.mxu0 %v1626
    %1665 = vmatprep.subr.mxu0 0.0
    %1666 = vmatpush1.msra.mxu0 %v1627
    %1667 = vmatprep.subr.mxu0 0.0
    %1668 = vmatpush1.msra.mxu0 %v1628
    %1669 = vmatprep.subr.mxu0 0.0
    %1670 = vmatpush1.msra.mxu0 0.0
    %1671 = vmatprep.subr.mxu0 0.0
    %1672 = vmatpush1.msra.mxu0 0.0
    %1673 = vmatprep.subr.mxu0 0.0
    %1674 = vmatpush1.msra.mxu0 0.0
    %1675 = vmatprep.subr.mxu0 0.0
    %1676 = vmatpush1.msra.mxu0 0.0
    %1677 = vmatprep.subr.mxu0 0.0
    %1678 = vmatpush1.msra.mxu0 0.0
    %1679 = vmatprep.subr.mxu0 0.0
    %1680 = vmatpush1.msra.mxu0 0.0
    %1681 = vmatprep.subr.mxu0 0.0
    %1682 = vmatpush1.msra.mxu0 0.0
    %1683 = vmatprep.subr.mxu0 0.0
    %1684 = vmatpush1.msra.mxu0 0.0
    %1685 = vmatprep.subr.mxu0 0.0
    %1686 = vmatpush1.msra.mxu0 0.0
    %1687 = vmatprep.subr.mxu0 0.0
    %1688 = vmatpush1.msra.mxu0 0.0
    %1689 = vmatprep.subr.mxu0 0.0
    %1690 = vmatpush1.msra.mxu0 0.0
    %1691 = vmatprep.subr.mxu0 0.0
    %1692 = vmatpush1.msra.mxu0 0.0
    %1693 = vmatprep.subr.mxu0 0.0
    %1694 = vmatpush1.msra.mxu0 0.0
    %1695 = vmatprep.subr.mxu0 0.0
    %1696 = vmatpush1.msra.mxu0 0.0
    %1697 = vmatprep.subr.mxu0 0.0
    %1698 = vmatpush1.msra.mxu0 0.0
    %1699 = vmatprep.subr.mxu0 0.0
    %1700 = vmatpush1.msra.mxu0 0.0
    %1701 = vmatprep.mubr.f32.mxu0 0.0
    %1702 = vmatmul.mubr.f32.gmra.mrb[0].mxu0 %v1596
    %v1703 = vpop.f32.mrb[0].mxu0
    %v1704 = vadd.f32 %v1635, %v1703
    %v1705 = vpop.f32.mrb[0].mxu0
    %1706 = vmatprep.mubr.f32.mxu0 0.0
    %1707 = vmatmul.mubr.f32.gmra.mrb[0].mxu0 %v1597
    %v1708 = vpop.f32.mrb[0].mxu0
    %v1709 = vadd.f32 %v1635, %v1708
    %v1710 = vpop.f32.mrb[0].mxu0
    %1711 = vmatprep.mubr.f32.mxu0 0.0
    %1712 = vmatmul.mubr.f32.gmra.mrb[0].mxu0 %v1598
    %v1713 = vpop.f32.mrb[0].mxu0
    %v1714 = vadd.f32 %v1635, %v1713
    %v1715 = vpop.f32.mrb[0].mxu0
    %1716 = vmatprep.mubr.f32.mxu0 0.0
    %1717 = vmatmul.mubr.f32.gmra.mrb[0].mxu0 %v1599
    %v1718 = vpop.f32.mrb[0].mxu0
    %v1719 = vadd.f32 %v1635, %v1718
    %v1720 = vpop.f32.mrb[0].mxu0
    %1721 = vmatprep.mubr.f32.mxu0 0.0
    %1722 = vmatmul.mubr.f32.gmra.mrb[0].mxu0 %v1600
    %v1723 = vpop.f32.mrb[0].mxu0
    %v1724 = vadd.f32 %v1635, %v1723
    %v1725 = vpop.f32.mrb[0].mxu0
    %1726 = vmatprep.mubr.f32.mxu0 0.0
    %1727 = vmatmul.mubr.f32.gmra.mrb[0].mxu0 %v1601
    %v1728 = vpop.f32.mrb[0].mxu0
    %v1729 = vadd.f32 %v1635, %v1728
    %v1730 = vpop.f32.mrb[0].mxu0
    %1731 = vmatprep.mubr.f32.mxu0 0.0
    %1732 = vmatmul.mubr.f32.gmra.mrb[0].mxu0 %v1602
    %v1733 = vpop.f32.mrb[0].mxu0
    %v1734 = vadd.f32 %v1635, %v1733
    %v1735 = vpop.f32.mrb[0].mxu0
    %1736 = vmatprep.mubr.f32.mxu0 0.0
    %1737 = vmatmul.mubr.f32.gmra.mrb[0].mxu0 %v1603
    %v1738 = vpop.f32.mrb[0].mxu0
    %v1739 = vadd.f32 %v1635, %v1738
    %v1740 = vpop.f32.mrb[0].mxu0
    %1741 = vmatprep.mubr.f32.mxu0 0.0
    %1742 = vmatmul.mubr.f32.gmra.mrb[0].mxu0 %v1604
    %v1743 = vpop.f32.mrb[0].mxu0
    %v1744 = vadd.f32 %v1635, %v1743
    %v1745 = vpop.f32.mrb[0].mxu0
    %1746 = vmatprep.mubr.f32.mxu0 0.0
    %1747 = vmatmul.mubr.f32.gmra.mrb[0].mxu0 %v1605
    %v1748 = vpop.f32.mrb[0].mxu0
    %v1749 = vadd.f32 %v1635, %v1748
    %v1750 = vpop.f32.mrb[0].mxu0
    %1751 = vmatprep.mubr.f32.mxu0 0.0
    %1752 = vmatmul.mubr.f32.gmra.mrb[0].mxu0 %v1606
    %v1753 = vpop.f32.mrb[0].mxu0
    %v1754 = vadd.f32 %v1635, %v1753
    %v1755 = vpop.f32.mrb[0].mxu0
    %1756 = vmatprep.mubr.f32.mxu0 0.0
    %1757 = vmatmul.mubr.f32.gmra.mrb[0].mxu0 %v1607
    %v1758 = vpop.f32.mrb[0].mxu0
    %v1759 = vadd.f32 %v1635, %v1758
    %v1760 = vpop.f32.mrb[0].mxu0
    %1761 = vmatprep.mubr.f32.mxu0 0.0
    %1762 = vmatmul.mubr.f32.gmra.mrb[0].mxu0 %v1608
    %v1763 = vpop.f32.mrb[0].mxu0
    %v1764 = vadd.f32 %v1635, %v1763
    %v1765 = vpop.f32.mrb[0].mxu0
    %1766 = vmatprep.mubr.f32.mxu0 0.0
    %1767 = vmatmul.mubr.f32.gmra.mrb[0].mxu0 %v1609
    %v1768 = vpop.f32.mrb[0].mxu0
    %v1769 = vadd.f32 %v1635, %v1768
    %v1770 = vpop.f32.mrb[0].mxu0
    %1771 = vmatprep.mubr.f32.mxu0 0.0
    %1772 = vmatmul.mubr.f32.gmra.mrb[0].mxu0 %v1610
    %v1773 = vpop.f32.mrb[0].mxu0
    %v1774 = vadd.f32 %v1635, %v1773
    %v1775 = vpop.f32.mrb[0].mxu0
    %1776 = vmatprep.mubr.f32.mxu0 0.0
    %1777 = vmatmul.mubr.f32.gmra.mrb[0].mxu0 %v1611
    %v1778 = vpop.f32.mrb[0].mxu0
    %v1779 = vadd.f32 %v1635, %v1778
    %v1780 = vpop.f32.mrb[0].mxu0
    %1781 = vdwg.mxu0
    %v1782 = vmax.f32 %v1704, 0.0
    %v1783 = vmax.f32 %v1709, 0.0
    %v1784 = vmax.f32 %v1714, 0.0
    %v1785 = vmax.f32 %v1719, 0.0
    %v1786 = vmax.f32 %v1724, 0.0
    %v1787 = vmax.f32 %v1729, 0.0
    %v1788 = vmax.f32 %v1734, 0.0
    %v1789 = vmax.f32 %v1739, 0.0
    %v1790 = vmax.f32 %v1744, 0.0
    %v1791 = vmax.f32 %v1749, 0.0
    %v1792 = vmax.f32 %v1754, 0.0
    %v1793 = vmax.f32 %v1759, 0.0
    %v1794 = vmax.f32 %v1764, 0.0
    %v1795 = vmax.f32 %v1769, 0.0
    %v1796 = vmax.f32 %v1774, 0.0
    %v1797 = vmax.f32 %v1779, 0.0
    %s1798 = scalar_lea.vmem %s7, 1
    %v1799 = vld [vmem:[%s1798] sm:$0x1]
    %v1801 = vlaneseq
    %v1802 = vshrl.u32 %v1801, 7
    %v1803 = vsub.s32 0, %v1802
    %v1804 = vrot.slane %v1799, %v1803
    %v1806 = vmul.f32 %v1782, %v1804
    %v1807 = vmul.f32 %v1783, %v1804
    %v1808 = vmul.f32 %v1784, %v1804
    %v1809 = vmul.f32 %v1785, %v1804
    %v1810 = vmul.f32 %v1786, %v1804
    %v1811 = vmul.f32 %v1787, %v1804
    %v1812 = vmul.f32 %v1788, %v1804
    %v1813 = vmul.f32 %v1789, %v1804
    %v1814 = vmul.f32 %v1790, %v1804
    %v1815 = vmul.f32 %v1791, %v1804
    %v1816 = vmul.f32 %v1792, %v1804
    %v1817 = vmul.f32 %v1793, %v1804
    %v1818 = vmul.f32 %v1794, %v1804
    %v1819 = vmul.f32 %v1795, %v1804
    %v1820 = vmul.f32 %v1796, %v1804
    %v1821 = vmul.f32 %v1797, %v1804
    %s1822 = scalar_lea.vmem %s8, 1
    %v1823 = vld [vmem:[%s1822] sm:$0x1]
    %v1825 = vlaneseq
    %v1826 = vshrl.u32 %v1825, 7
    %v1827 = vsub.s32 0, %v1826
    %v1828 = vrot.slane %v1823, %v1827
    %v1830 = vadd.f32 %v1806, %v1828
    %v1831 = vadd.f32 %v1807, %v1828
    %v1832 = vadd.f32 %v1808, %v1828
    %v1833 = vadd.f32 %v1809, %v1828
    %v1834 = vadd.f32 %v1810, %v1828
    %v1835 = vadd.f32 %v1811, %v1828
    %v1836 = vadd.f32 %v1812, %v1828
    %v1837 = vadd.f32 %v1813, %v1828
    %v1838 = vadd.f32 %v1814, %v1828
    %v1839 = vadd.f32 %v1815, %v1828
    %v1840 = vadd.f32 %v1816, %v1828
    %v1841 = vadd.f32 %v1817, %v1828
    %v1842 = vadd.f32 %v1818, %v1828
    %v1843 = vadd.f32 %v1819, %v1828
    %v1844 = vadd.f32 %v1820, %v1828
    %v1845 = vadd.f32 %v1821, %v1828
    %v1846 = vmax.f32 %v1830, 0.0
    %v1847 = vmax.f32 %v1831, 0.0
    %v1848 = vmax.f32 %v1832, 0.0
    %v1849 = vmax.f32 %v1833, 0.0
    %v1850 = vmax.f32 %v1834, 0.0
    %v1851 = vmax.f32 %v1835, 0.0
    %v1852 = vmax.f32 %v1836, 0.0
    %v1853 = vmax.f32 %v1837, 0.0
    %v1854 = vmax.f32 %v1838, 0.0
    %v1855 = vmax.f32 %v1839, 0.0
    %v1856 = vmax.f32 %v1840, 0.0
    %v1857 = vmax.f32 %v1841, 0.0
    %v1858 = vmax.f32 %v1842, 0.0
    %v1859 = vmax.f32 %v1843, 0.0
    %v1860 = vmax.f32 %v1844, 0.0
    %v1861 = vmax.f32 %v1845, 0.0
    %v1862 = vadd.f32 %v1846, %v1068
    %v1863 = vadd.f32 %v1847, %v1069
    %v1864 = vadd.f32 %v1848, %v1070
    %v1865 = vadd.f32 %v1849, %v1071
    %v1866 = vadd.f32 %v1850, %v1072
    %v1867 = vadd.f32 %v1851, %v1073
    %v1868 = vadd.f32 %v1852, %v1074
    %v1869 = vadd.f32 %v1853, %v1075
    %v1870 = vadd.f32 %v1854, %v1076
    %v1871 = vadd.f32 %v1855, %v1077
    %v1872 = vadd.f32 %v1856, %v1078
    %v1873 = vadd.f32 %v1857, %v1079
    %v1874 = vadd.f32 %v1858, %v1080
    %v1875 = vadd.f32 %v1859, %v1081
    %v1876 = vadd.f32 %v1860, %v1082
    %v1877 = vadd.f32 %v1861, %v1083
    %s1878 = scalar_lea.vmem [#allocation6], 256
    %v1879 = vld [vmem:[%s1878] sm:$0xff]
    %v1880 = vld [vmem:[%s1878 + $0x8] sm:$0xff]
    %v1881 = vld [vmem:[%s1878 + $0x10] sm:$0xff]
    %v1882 = vld [vmem:[%s1878 + $0x18] sm:$0xff]
    %v1883 = vld [vmem:[%s1878 + $0x20] sm:$0xff]
    %v1884 = vld [vmem:[%s1878 + $0x28] sm:$0xff]
    %v1885 = vld [vmem:[%s1878 + $0x30] sm:$0xff]
    %v1886 = vld [vmem:[%s1878 + $0x38] sm:$0xff]
    %v1887 = vld [vmem:[%s1878 + $0x40] sm:$0xff]
    %v1888 = vld [vmem:[%s1878 + $0x48] sm:$0xff]
    %v1889 = vld [vmem:[%s1878 + $0x50] sm:$0xff]
    %v1890 = vld [vmem:[%s1878 + $0x58] sm:$0xff]
    %v1891 = vld [vmem:[%s1878 + $0x60] sm:$0xff]
    %v1892 = vld [vmem:[%s1878 + $0x68] sm:$0xff]
    %v1893 = vld [vmem:[%s1878 + $0x70] sm:$0xff]
    %v1894 = vld [vmem:[%s1878 + $0x78] sm:$0xff]
    %1895 = vmatprep.subr.mxu0 0.0
    %1896 = vmatpush1.msra.mxu0 %v1879
    %1897 = vmatprep.subr.mxu0 0.0
    %1898 = vmatpush1.msra.mxu0 %v1880
    %1899 = vmatprep.subr.mxu0 0.0
    %1900 = vmatpush1.msra.mxu0 %v1881
    %1901 = vmatprep.subr.mxu0 0.0
    %1902 = vmatpush1.msra.mxu0 %v1882
    %1903 = vmatprep.subr.mxu0 0.0
    %1904 = vmatpush1.msra.mxu0 %v1883
    %1905 = vmatprep.subr.mxu0 0.0
    %1906 = vmatpush1.msra.mxu0 %v1884
    %1907 = vmatprep.subr.mxu0 0.0
    %1908 = vmatpush1.msra.mxu0 %v1885
    %1909 = vmatprep.subr.mxu0 0.0
    %1910 = vmatpush1.msra.mxu0 %v1886
    %1911 = vmatprep.subr.mxu0 0.0
    %1912 = vmatpush1.msra.mxu0 %v1887
    %1913 = vmatprep.subr.mxu0 0.0
    %1914 = vmatpush1.msra.mxu0 %v1888
    %1915 = vmatprep.subr.mxu0 0.0
    %1916 = vmatpush1.msra.mxu0 %v1889
    %1917 = vmatprep.subr.mxu0 0.0
    %1918 = vmatpush1.msra.mxu0 %v1890
    %1919 = vmatprep.subr.mxu0 0.0
    %1920 = vmatpush1.msra.mxu0 %v1891
    %1921 = vmatprep.subr.mxu0 0.0
    %1922 = vmatpush1.msra.mxu0 %v1892
    %1923 = vmatprep.subr.mxu0 0.0
    %1924 = vmatpush1.msra.mxu0 %v1893
    %1925 = vmatprep.subr.mxu0 0.0
    %1926 = vmatpush1.msra.mxu0 %v1894
    %1927 = vmatprep.subr.mxu0 0.0
    %1928 = vmatpush1.msra.mxu0 0.0
    %1929 = vmatprep.subr.mxu0 0.0
    %1930 = vmatpush1.msra.mxu0 0.0
    %1931 = vmatprep.subr.mxu0 0.0
    %1932 = vmatpush1.msra.mxu0 0.0
    %1933 = vmatprep.subr.mxu0 0.0
    %1934 = vmatpush1.msra.mxu0 0.0
    %1935 = vmatprep.subr.mxu0 0.0
    %1936 = vmatpush1.msra.mxu0 0.0
    %1937 = vmatprep.subr.mxu0 0.0
    %1938 = vmatpush1.msra.mxu0 0.0
    %1939 = vmatprep.subr.mxu0 0.0
    %1940 = vmatpush1.msra.mxu0 0.0
    %1941 = vmatprep.subr.mxu0 0.0
    %1942 = vmatpush1.msra.mxu0 0.0
    %1943 = vmatprep.subr.mxu0 0.0
    %1944 = vmatpush1.msra.mxu0 0.0
    %1945 = vmatprep.subr.mxu0 0.0
    %1946 = vmatpush1.msra.mxu0 0.0
    %1947 = vmatprep.subr.mxu0 0.0
    %1948 = vmatpush1.msra.mxu0 0.0
    %1949 = vmatprep.subr.mxu0 0.0
    %1950 = vmatpush1.msra.mxu0 0.0
    %1951 = vmatprep.subr.mxu0 0.0
    %1952 = vmatpush1.msra.mxu0 0.0
    %1953 = vmatprep.subr.mxu0 0.0
    %1954 = vmatpush1.msra.mxu0 0.0
    %1955 = vmatprep.subr.mxu0 0.0
    %1956 = vmatpush1.msra.mxu0 0.0
    %1957 = vmatprep.subr.mxu0 0.0
    %1958 = vmatpush1.msra.mxu0 0.0
    %1959 = vmatprep.mubr.f32.mxu0 0.0
    %1960 = vmatmul.mubr.f32.gmra.mrb[0].mxu0 %v1862
    %v1961 = vpop.f32.mrb[0].mxu0
    %v1962 = vadd.f32 0.0, %v1961
    %v1963 = vpop.f32.mrb[0].mxu0
    %1964 = vmatprep.mubr.f32.mxu0 0.0
    %1965 = vmatmul.mubr.f32.gmra.mrb[0].mxu0 %v1863
    %v1966 = vpop.f32.mrb[0].mxu0
    %v1967 = vadd.f32 0.0, %v1966
    %v1968 = vpop.f32.mrb[0].mxu0
    %1969 = vmatprep.mubr.f32.mxu0 0.0
    %1970 = vmatmul.mubr.f32.gmra.mrb[0].mxu0 %v1864
    %v1971 = vpop.f32.mrb[0].mxu0
    %v1972 = vadd.f32 0.0, %v1971
    %v1973 = vpop.f32.mrb[0].mxu0
    %1974 = vmatprep.mubr.f32.mxu0 0.0
    %1975 = vmatmul.mubr.f32.gmra.mrb[0].mxu0 %v1865
    %v1976 = vpop.f32.mrb[0].mxu0
    %v1977 = vadd.f32 0.0, %v1976
    %v1978 = vpop.f32.mrb[0].mxu0
    %1979 = vmatprep.mubr.f32.mxu0 0.0
    %1980 = vmatmul.mubr.f32.gmra.mrb[0].mxu0 %v1866
    %v1981 = vpop.f32.mrb[0].mxu0
    %v1982 = vadd.f32 0.0, %v1981
    %v1983 = vpop.f32.mrb[0].mxu0
    %1984 = vmatprep.mubr.f32.mxu0 0.0
    %1985 = vmatmul.mubr.f32.gmra.mrb[0].mxu0 %v1867
    %v1986 = vpop.f32.mrb[0].mxu0
    %v1987 = vadd.f32 0.0, %v1986
    %v1988 = vpop.f32.mrb[0].mxu0
    %1989 = vmatprep.mubr.f32.mxu0 0.0
    %1990 = vmatmul.mubr.f32.gmra.mrb[0].mxu0 %v1868
    %v1991 = vpop.f32.mrb[0].mxu0
    %v1992 = vadd.f32 0.0, %v1991
    %v1993 = vpop.f32.mrb[0].mxu0
    %1994 = vmatprep.mubr.f32.mxu0 0.0
    %1995 = vmatmul.mubr.f32.gmra.mrb[0].mxu0 %v1869
    %v1996 = vpop.f32.mrb[0].mxu0
    %v1997 = vadd.f32 0.0, %v1996
    %v1998 = vpop.f32.mrb[0].mxu0
    %1999 = vmatprep.mubr.f32.mxu0 0.0
    %2000 = vmatmul.mubr.f32.gmra.mrb[0].mxu0 %v1870
    %v2001 = vpop.f32.mrb[0].mxu0
    %v2002 = vadd.f32 0.0, %v2001
    %v2003 = vpop.f32.mrb[0].mxu0
    %2004 = vmatprep.mubr.f32.mxu0 0.0
    %2005 = vmatmul.mubr.f32.gmra.mrb[0].mxu0 %v1871
    %v2006 = vpop.f32.mrb[0].mxu0
    %v2007 = vadd.f32 0.0, %v2006
    %v2008 = vpop.f32.mrb[0].mxu0
    %2009 = vmatprep.mubr.f32.mxu0 0.0
    %2010 = vmatmul.mubr.f32.gmra.mrb[0].mxu0 %v1872
    %v2011 = vpop.f32.mrb[0].mxu0
    %v2012 = vadd.f32 0.0, %v2011
    %v2013 = vpop.f32.mrb[0].mxu0
    %2014 = vmatprep.mubr.f32.mxu0 0.0
    %2015 = vmatmul.mubr.f32.gmra.mrb[0].mxu0 %v1873
    %v2016 = vpop.f32.mrb[0].mxu0
    %v2017 = vadd.f32 0.0, %v2016
    %v2018 = vpop.f32.mrb[0].mxu0
    %2019 = vmatprep.mubr.f32.mxu0 0.0
    %2020 = vmatmul.mubr.f32.gmra.mrb[0].mxu0 %v1874
    %v2021 = vpop.f32.mrb[0].mxu0
    %v2022 = vadd.f32 0.0, %v2021
    %v2023 = vpop.f32.mrb[0].mxu0
    %2024 = vmatprep.mubr.f32.mxu0 0.0
    %2025 = vmatmul.mubr.f32.gmra.mrb[0].mxu0 %v1875
    %v2026 = vpop.f32.mrb[0].mxu0
    %v2027 = vadd.f32 0.0, %v2026
    %v2028 = vpop.f32.mrb[0].mxu0
    %2029 = vmatprep.mubr.f32.mxu0 0.0
    %2030 = vmatmul.mubr.f32.gmra.mrb[0].mxu0 %v1876
    %v2031 = vpop.f32.mrb[0].mxu0
    %v2032 = vadd.f32 0.0, %v2031
    %v2033 = vpop.f32.mrb[0].mxu0
    %2034 = vmatprep.mubr.f32.mxu0 0.0
    %2035 = vmatmul.mubr.f32.gmra.mrb[0].mxu0 %v1877
    %v2036 = vpop.f32.mrb[0].mxu0
    %v2037 = vadd.f32 0.0, %v2036
    %v2038 = vpop.f32.mrb[0].mxu0
    %2039 = vdwg.mxu0
    %v2040 = vadd.f32 %v1270, %v1962
    %v2041 = vadd.f32 %v1271, %v1967
    %v2042 = vadd.f32 %v1272, %v1972
    %v2043 = vadd.f32 %v1273, %v1977
    %v2044 = vadd.f32 %v1274, %v1982
    %v2045 = vadd.f32 %v1275, %v1987
    %v2046 = vadd.f32 %v1276, %v1992
    %v2047 = vadd.f32 %v1277, %v1997
    %v2048 = vadd.f32 %v1278, %v2002
    %v2049 = vadd.f32 %v1279, %v2007
    %v2050 = vadd.f32 %v1280, %v2012
    %v2051 = vadd.f32 %v1281, %v2017
    %v2052 = vadd.f32 %v1282, %v2022
    %v2053 = vadd.f32 %v1283, %v2027
    %v2054 = vadd.f32 %v1284, %v2032
    %v2055 = vadd.f32 %v1285, %v2037
    %s2056 = scalar_lea.vmem %s10, 2
    %v2057 = vld [vmem:[%s2056] sm:$0x1]
    %v2059 = vlaneseq
    %v2060 = vshrl.u32 %v2059, 7
    %v2061 = vsub.s32 0, %v2060
    %v2062 = vrot.slane %v2057, %v2061
    %v2064 = vadd.f32 %v2040, %v2062
    %v2065 = vadd.f32 %v2041, %v2062
    %v2066 = vadd.f32 %v2042, %v2062
    %v2067 = vadd.f32 %v2043, %v2062
    %v2068 = vadd.f32 %v2044, %v2062
    %v2069 = vadd.f32 %v2045, %v2062
    %v2070 = vadd.f32 %v2046, %v2062
    %v2071 = vadd.f32 %v2047, %v2062
    %v2072 = vadd.f32 %v2048, %v2062
    %v2073 = vadd.f32 %v2049, %v2062
    %v2074 = vadd.f32 %v2050, %v2062
    %v2075 = vadd.f32 %v2051, %v2062
    %v2076 = vadd.f32 %v2052, %v2062
    %v2077 = vadd.f32 %v2053, %v2062
    %v2078 = vadd.f32 %v2054, %v2062
    %v2079 = vadd.f32 %v2055, %v2062
    %2080 = vst [vmem:[%s11] sm:$0xff] %v2064
    %2081 = vst [vmem:[%s11 + $0x8] sm:$0xff] %v2065
    %2082 = vst [vmem:[%s11 + $0x10] sm:$0xff] %v2066
    %2083 = vst [vmem:[%s11 + $0x18] sm:$0xff] %v2067
    %2084 = vst [vmem:[%s11 + $0x20] sm:$0xff] %v2068
    %2085 = vst [vmem:[%s11 + $0x28] sm:$0xff] %v2069
    %2086 = vst [vmem:[%s11 + $0x30] sm:$0xff] %v2070
    %2087 = vst [vmem:[%s11 + $0x38] sm:$0xff] %v2071
    %2088 = vst [vmem:[%s11 + $0x40] sm:$0xff] %v2072
    %2089 = vst [vmem:[%s11 + $0x48] sm:$0xff] %v2073
    %2090 = vst [vmem:[%s11 + $0x50] sm:$0xff] %v2074
    %2091 = vst [vmem:[%s11 + $0x58] sm:$0xff] %v2075
    %2092 = vst [vmem:[%s11 + $0x60] sm:$0xff] %v2076
    %2093 = vst [vmem:[%s11 + $0x68] sm:$0xff] %v2077
    %2094 = vst [vmem:[%s11 + $0x70] sm:$0xff] %v2078
    %2095 = vst [vmem:[%s11 + $0x78] sm:$0xff] %v2079
    // Predicated region
    $region58: #{ginnet_forward.1} parent=1 // pred_check
      _
    $region59: #{ginnet_forward.1} parent=1 // pred_check_branch
      %2097 = sbr.rel (0) target = $region61
    $region60: #{ginnet_forward.1} parent=1 // pred_region
      _
    $region61: #{ginnet_forward.1} parent=1 // pred_fallthru
      _
    // Predicated region
    $region62: #{ginnet_forward.1} parent=1 // pred_check
      _
    $region63: #{ginnet_forward.1} parent=1 // pred_check_branch
      %2099 = sbr.rel (0) target = $region65
    $region64: #{ginnet_forward.1} parent=1 // pred_region
      _
    $region65: #{ginnet_forward.1} parent=1 // pred_fallthru
      _
    %2100 = vsyncpa [#allocation3], 1
    %2101 = vsyncpa [#allocation7], 1
    %2102 = vsyncpa [#allocation4], 1

</llo_original>
